<compile_context>
chip_gen: v6e
topology: v6e:2x2x1
jax: 0.10.0
libtpu: 0.0.40
codegen_flags: <defaults>
</compile_context>

<pallas_src>
import functools

import jax
import jax.numpy as jnp
from jax import lax
from jax.experimental import pallas as pl
from jax.experimental.pallas import tpu as pltpu


def _graph_transformer_kernel(num_layers, hidden, *refs):
    out_ref = refs[-1]
    in_refs = refs[:-1]
    pos = [0]

    def nxt():
        r = in_refs[pos[0]]
        pos[0] += 1
        return r[...]

    f32 = jnp.float32
    bf16 = jnp.bfloat16
    H = hidden
    inv_sqrt_c = jnp.float32(1.0 / (H ** 0.5))

    x = nxt()            # [N, F0] f32
    S_src = nxt()        # [E, N] bf16 one-hot of edge source j
    S_tgt = nxt()        # [E, N] bf16 one-hot of edge target i
    S_tgt_T = nxt()      # [N, E] bf16 (precomputed transpose, hoisted out of loop)
    eattr = nxt()        # [E, De] bf16
    B_T = nxt()          # [G, N] bf16 graph-assignment one-hot, transposed

    # TODO(synk): on v7x (64 MiB VMEM) drop S_tgt and derive the q-gather from
    # S_tgt_T with a transposed-LHS dot_general (or go fully sparse, see wrapper
    # TODO) so only one E*N matrix is resident.

    h = x
    acc = jnp.zeros((x.shape[0], H), dtype=f32)

    for _ in range(num_layers):
        W4 = nxt()       # [F_in, 4H] bf16 = [Wq | Wk | Wv | Wskip]
        b4 = nxt()       # [1, 4H] f32
        We = nxt()       # [De, H] bf16
        Wt = nxt()       # [H, H] bf16
        small = nxt()    # [5, H] f32 rows: bt, bn_scale, bn_shift, wb_agg, wb_xr

        bt = small[0:1, :]
        bn_scale = small[1:2, :]
        bn_shift = small[2:3, :]
        wb_agg = small[3:4, :]
        wb_xr = small[4:5, :]

        # ---- TransformerConv (heads=1, concat, beta=True, edge_dim) ----
        # Fused lane-dense projection (bf16 operands, f32 accumulation).
        QKVS = jnp.dot(h.astype(bf16), W4, preferred_element_type=f32) + b4   # [N, 4H]
        x_r = QKVS[:, 3 * H:4 * H]                                            # skip branch
        qkvs_b = QKVS.astype(bf16)

        # Gathers sliced to only the needed columns:
        #   q at the target node  -> [E, H]
        #   k|v at the source node -> [E, 2H]
        q_e = jnp.dot(S_tgt, qkvs_b[:, 0:H], preferred_element_type=f32)
        G_src = jnp.dot(S_src, qkvs_b[:, H:3 * H], preferred_element_type=f32)

        Ep = jnp.dot(eattr, We, preferred_element_type=f32)                   # [E, H]
        k_e = G_src[:, 0:H] + Ep
        v_e = G_src[:, H:2 * H] + Ep

        logits = jnp.sum(q_e * k_e, axis=-1, keepdims=True) * inv_sqrt_c      # [E, 1]
        # Segment softmax with a single global-max shift (shift-invariant per
        # segment). TODO(synk): if per-segment logit ranges can sit >~80 below
        # the global max, switch to a true per-segment max to avoid silent
        # exp() underflow for that segment.
        ex = jnp.exp(logits - jnp.max(logits))                                # [E, 1]

        # Fused scatter: value columns AND the softmax denominator in ONE pass
        # over S_tgt_T (single MXU streaming of the E*N matrix).
        sc_rhs = jnp.concatenate([ex * v_e, ex], axis=-1).astype(bf16)        # [E, H+1]
        nsc = jnp.dot(S_tgt_T, sc_rhs, preferred_element_type=f32)            # [N, H+1]
        denom = nsc[:, H:H + 1]
        denom = jnp.where(denom > 0.0, denom, 1.0)     # isolated nodes -> agg stays 0
        agg = nsc[:, 0:H] * pl.reciprocal(denom, approx=True)

        # Beta gate with folded weights (VPU dot + lane reduce, no MXU).
        beta_logit = jnp.sum(agg * wb_agg + x_r * wb_xr, axis=-1, keepdims=True)
        beta = jax.nn.sigmoid(beta_logit)                                     # [N, 1]
        conv_out = beta * x_r + (1.0 - beta) * agg                            # [N, H]

        # ---- relu(Linear) + BatchNorm1d (eval, folded to scale/shift) ----
        t = jnp.maximum(
            jnp.dot(conv_out.astype(bf16), Wt, preferred_element_type=f32) + bt, 0.0)
        t = t * bn_scale + bn_shift

        acc = acc + t
        h = t

    wg = nxt()           # [1, H]  gate_nn weight (row)
    bg = nxt()           # [1, 1]
    W1 = nxt(); b1 = nxt()
    W2 = nxt(); b2 = nxt()

    # ---- AttentionalAggregation: per-graph softmax gate, weighted sum ----
    gate = jnp.sum(acc * wg, axis=-1, keepdims=True) + bg                     # [N, 1]
    exg = jnp.exp(gate - jnp.max(gate))                                       # [N, 1]
    # Fused pooled-sum + denominator in one pass over B_T.
    p_rhs = jnp.concatenate([exg * acc, exg], axis=-1).astype(bf16)           # [N, H+1]
    psc = jnp.dot(B_T, p_rhs, preferred_element_type=f32)                     # [G, H+1]
    den = psc[:, H:H + 1]
    den = jnp.where(den > 0.0, den, 1.0)               # guard empty graphs (no NaN)
    pooled = psc[:, 0:H] * pl.reciprocal(den, approx=True)

    # ---- MLP head ----
    h1 = jnp.maximum(
        jnp.dot(pooled.astype(bf16), W1, preferred_element_type=f32) + b1, 0.0)
    # TODO(synk): F.dropout is a no-op here (eval-mode semantics).
    out = jnp.dot(h1.astype(bf16), W2, preferred_element_type=f32) + b2       # [G, C_out]
    out_ref[...] = out


def _vmem_limit_bytes(inputs, n_nodes, n_edges, hidden):
    """Generation-aware VMEM limit: working-set heuristic capped at 75% physical."""
    total_in = sum(int(a.size) * a.dtype.itemsize for a in inputs)
    # Dominant live intermediates per layer (f32): QKVS (+ bf16 copy), gathered
    # q/k|v, edge proj, fused scatter rhs/out.
    interm = 4 * (n_nodes * (4 * hidden * 2 + 2 * hidden)
                  + n_edges * (6 * hidden + 2 * (hidden + 1)))
    want = 2 * total_in + 2 * interm + (16 << 20)
    cap = 64 << 20                      # conservative default (v7x per-TC VMEM)
    try:
        cap = int(getattr(pltpu.get_tpu_info(), "vmem_capacity_bytes", cap))
    except Exception:
        pass
    return int(min(max(want, 32 << 20), (cap * 3) // 4))


def graph_transformer_forward(x, edge_index, edge_attr, batch_index, params, num_graphs):
    n_nodes = x.shape[0]
    n_edges = edge_index.shape[1]
    hidden = params["hidden"]
    out_channels = params["W2"].shape[1]
    f32 = jnp.float32
    bf16 = jnp.bfloat16

    # 0/1 one-hots are exact in bf16: halves their VMEM/HBM footprint and
    # enables bf16 MXU gathers/scatters (f32 accumulation inside the kernel).
    S_src = jax.nn.one_hot(edge_index[0], n_nodes, dtype=bf16)     # [E, N]
    S_tgt = jax.nn.one_hot(edge_index[1], n_nodes, dtype=bf16)     # [E, N]
    S_tgt_T = S_tgt.T                                              # [N, E] (hoisted)
    B_T = jax.nn.one_hot(batch_index, num_graphs, dtype=bf16).T    # [G, N]

    inputs = [x.astype(f32), S_src, S_tgt, S_tgt_T, edge_attr.astype(bf16), B_T]
    for lp in params["layers"]:
        W4 = jnp.concatenate(
            [lp["Wq"], lp["Wk"], lp["Wv"], lp["Wskip"]], axis=1).astype(bf16)
        b4 = jnp.concatenate(
            [lp["bq"], lp["bk"], lp["bv"], lp["bskip"]], axis=1).astype(f32)
        wb_agg = (lp["Wb1"] + lp["Wb3"]).T        # folded beta-gate weights [1, H]
        wb_xr = (lp["Wb2"] - lp["Wb3"]).T
        small = jnp.concatenate(
            [lp["bt"], lp["bn_scale"], lp["bn_shift"], wb_agg, wb_xr],
            axis=0).astype(f32)
        inputs += [W4, b4, lp["We"].astype(bf16), lp["Wt"].astype(bf16), small]
    inputs += [params["Wg"].T.astype(f32), params["bg"].astype(f32),
               params["W1"].astype(bf16), params["b1"].astype(f32),
               params["W2"].astype(bf16), params["b2"].astype(f32)]

    kernel = functools.partial(_graph_transformer_kernel, len(params["layers"]), hidden)
    vmem_limit = _vmem_limit_bytes(inputs, n_nodes, n_edges, hidden)

    # TODO(synk): for production graph sizes, replace the dense one-hot
    # gather/scatter with an edge-tiled PrefetchScalarGridSpec pipeline
    # (edge_index as scalar-prefetch, node-resident VMEM accumulator finalized
    # with pl.when on the last edge tile), stack per-layer weights on an
    # 'arbitrary' grid axis so they are double-buffered instead of all
    # resident, add a 'parallel' node-tile axis so v7x's second TensorCore is
    # used, and (if H stays < 128) pad each q/k/v/skip block to a 128-lane
    # boundary so the column slices land on vreg tile boundaries.
    return pl.pallas_call(
        kernel,
        out_shape=jax.ShapeDtypeStruct((num_graphs, out_channels), jnp.float32),
        in_specs=[pl.BlockSpec(memory_space=pltpu.MemorySpace.VMEM) for _ in inputs],
        out_specs=pl.BlockSpec(memory_space=pltpu.MemorySpace.VMEM),
        compiler_params=pltpu.CompilerParams(vmem_limit_bytes=vmem_limit),
    )(*inputs)


def init_params(key, in_channels, hidden_channels, out_channels, edge_dim, num_layers):
    def lin(k, fan_in, fan_out):
        k1, k2 = jax.random.split(k)
        bound = 1.0 / (fan_in ** 0.5)
        W = jax.random.uniform(k1, (fan_in, fan_out), jnp.float32, -bound, bound)
        b = jax.random.uniform(k2, (1, fan_out), jnp.float32, -bound, bound)
        return W, b

    hidden = hidden_channels
    layers = []
    f_in = in_channels
    for _ in range(num_layers):
        key, *ks = jax.random.split(key, 12)
        Wq, bq = lin(ks[0], f_in, hidden)
        Wk, bk = lin(ks[1], f_in, hidden)
        Wv, bv = lin(ks[2], f_in, hidden)
        We, _ = lin(ks[3], edge_dim, hidden)                 # lin_edge has no bias
        Wskip, bskip = lin(ks[4], f_in, hidden)
        Wbeta, _ = lin(ks[5], 3 * hidden, 1)                 # lin_beta has no bias
        Wb1, Wb2, Wb3 = Wbeta[:hidden], Wbeta[hidden:2 * hidden], Wbeta[2 * hidden:]
        Wt, bt = lin(ks[6], hidden, hidden)
        gamma = jax.random.uniform(ks[7], (1, hidden), jnp.float32, 0.5, 1.5)
        beta_bn = jax.random.uniform(ks[8], (1, hidden), jnp.float32, -0.5, 0.5)
        rm = jax.random.uniform(ks[9], (1, hidden), jnp.float32, -0.5, 0.5)
        rv = jax.random.uniform(ks[10], (1, hidden), jnp.float32, 0.5, 1.5)
        scale = gamma / jnp.sqrt(rv + 1e-5)
        shift = beta_bn - rm * scale
        layers.append(dict(Wq=Wq, bq=bq, Wk=Wk, bk=bk, Wv=Wv, bv=bv, We=We,
                           Wskip=Wskip, bskip=bskip, Wb1=Wb1, Wb2=Wb2, Wb3=Wb3,
                           Wt=Wt, bt=bt, bn_scale=scale, bn_shift=shift))
        f_in = hidden

    key, k1, k2, k3 = jax.random.split(key, 4)
    Wg, bg = lin(k1, hidden, 1)
    W1, b1 = lin(k2, hidden, hidden_channels // 2)
    W2, b2 = lin(k3, hidden_channels // 2, out_channels)

    return dict(hidden=hidden, layers=layers, Wg=Wg, bg=bg, W1=W1, b1=b1, W2=W2, b2=b2)


if __name__ == "__main__":
    in_channels = 8
    hidden_channels = 32
    out_channels = 4
    edge_dim = 8
    num_layers = 2
    n_nodes = 16
    n_edges = 32
    n_graphs = 2

    key = jax.random.PRNGKey(0)
    kx, ke, ki, kp = jax.random.split(key, 4)

    x = jax.random.normal(kx, (n_nodes, in_channels), jnp.float32)
    edge_attr = jax.random.normal(ke, (n_edges, edge_dim), jnp.float32)
    edge_index = jax.random.randint(ki, (2, n_edges), 0, n_nodes, jnp.int32)
    batch_index = jnp.concatenate(
        [jnp.zeros((n_nodes // 2,), jnp.int32),
         jnp.ones((n_nodes - n_nodes // 2,), jnp.int32)]
    )

    params = init_params(kp, in_channels, hidden_channels, out_channels, edge_dim, num_layers)

    out = graph_transformer_forward(x, edge_index, edge_attr, batch_index, params, n_graphs)
    out = jax.block_until_ready(out)
    assert out.shape == (n_graphs, out_channels)
    print("KERNEL_OK")
</pallas_src>

<mosaic_0001>
module attributes {stable_mosaic.version = 11 : i64} {
  func.func @_graph_transformer_kernel(%arg0: memref<16x8xf32, #tpu.memory_space<vmem>>, %arg1: memref<32x16xbf16, #tpu.memory_space<vmem>>, %arg2: memref<32x16xbf16, #tpu.memory_space<vmem>>, %arg3: memref<16x32xbf16, #tpu.memory_space<vmem>>, %arg4: memref<32x8xbf16, #tpu.memory_space<vmem>>, %arg5: memref<2x16xbf16, #tpu.memory_space<vmem>>, %arg6: memref<8x128xbf16, #tpu.memory_space<vmem>>, %arg7: memref<1x128xf32, #tpu.memory_space<vmem>>, %arg8: memref<8x32xbf16, #tpu.memory_space<vmem>>, %arg9: memref<32x32xbf16, #tpu.memory_space<vmem>>, %arg10: memref<5x32xf32, #tpu.memory_space<vmem>>, %arg11: memref<32x128xbf16, #tpu.memory_space<vmem>>, %arg12: memref<1x128xf32, #tpu.memory_space<vmem>>, %arg13: memref<8x32xbf16, #tpu.memory_space<vmem>>, %arg14: memref<32x32xbf16, #tpu.memory_space<vmem>>, %arg15: memref<5x32xf32, #tpu.memory_space<vmem>>, %arg16: memref<1x32xf32, #tpu.memory_space<vmem>>, %arg17: memref<1x1xf32, #tpu.memory_space<vmem>>, %arg18: memref<32x16xbf16, #tpu.memory_space<vmem>>, %arg19: memref<1x16xf32, #tpu.memory_space<vmem>>, %arg20: memref<16x4xbf16, #tpu.memory_space<vmem>>, %arg21: memref<1x4xf32, #tpu.memory_space<vmem>>, %arg22: memref<2x4xf32, #tpu.memory_space<vmem>>) attributes {dimension_semantics = [], scalar_prefetch = 0 : i64, scratch_operands = 0 : i64, tpu.core_type = #tpu.core_type<tc>} {
    %c0 = arith.constant 0 : index
    %c0_0 = arith.constant 0 : index
    %0 = vector.load %arg0[%c0, %c0_0] : memref<16x8xf32, #tpu.memory_space<vmem>>, vector<16x8xf32>
    %c0_1 = arith.constant 0 : index
    %c0_2 = arith.constant 0 : index
    %1 = vector.load %arg1[%c0_1, %c0_2] : memref<32x16xbf16, #tpu.memory_space<vmem>>, vector<32x16xbf16>
    %c0_3 = arith.constant 0 : index
    %c0_4 = arith.constant 0 : index
    %2 = vector.load %arg2[%c0_3, %c0_4] : memref<32x16xbf16, #tpu.memory_space<vmem>>, vector<32x16xbf16>
    %c0_5 = arith.constant 0 : index
    %c0_6 = arith.constant 0 : index
    %3 = vector.load %arg3[%c0_5, %c0_6] : memref<16x32xbf16, #tpu.memory_space<vmem>>, vector<16x32xbf16>
    %c0_7 = arith.constant 0 : index
    %c0_8 = arith.constant 0 : index
    %4 = vector.load %arg4[%c0_7, %c0_8] : memref<32x8xbf16, #tpu.memory_space<vmem>>, vector<32x8xbf16>
    %c0_9 = arith.constant 0 : index
    %c0_10 = arith.constant 0 : index
    %5 = vector.load %arg5[%c0_9, %c0_10] : memref<2x16xbf16, #tpu.memory_space<vmem>>, vector<2x16xbf16>
    %cst = arith.constant 0.000000e+00 : f32
    %6 = vector.broadcast %cst : f32 to vector<16x32xf32>
    %c0_11 = arith.constant 0 : index
    %c0_12 = arith.constant 0 : index
    %7 = vector.load %arg6[%c0_11, %c0_12] : memref<8x128xbf16, #tpu.memory_space<vmem>>, vector<8x128xbf16>
    %c0_13 = arith.constant 0 : index
    %c0_14 = arith.constant 0 : index
    %8 = vector.load %arg7[%c0_13, %c0_14] : memref<1x128xf32, #tpu.memory_space<vmem>>, vector<1x128xf32>
    %c0_15 = arith.constant 0 : index
    %c0_16 = arith.constant 0 : index
    %9 = vector.load %arg8[%c0_15, %c0_16] : memref<8x32xbf16, #tpu.memory_space<vmem>>, vector<8x32xbf16>
    %c0_17 = arith.constant 0 : index
    %c0_18 = arith.constant 0 : index
    %10 = vector.load %arg9[%c0_17, %c0_18] : memref<32x32xbf16, #tpu.memory_space<vmem>>, vector<32x32xbf16>
    %c0_19 = arith.constant 0 : index
    %c0_20 = arith.constant 0 : index
    %11 = vector.load %arg10[%c0_19, %c0_20] : memref<5x32xf32, #tpu.memory_space<vmem>>, vector<5x32xf32>
    %12 = vector.extract_strided_slice %11 {offsets = [0, 0], sizes = [1, 32], strides = [1, 1]} : vector<5x32xf32> to vector<1x32xf32>
    %13 = vector.extract_strided_slice %11 {offsets = [1, 0], sizes = [1, 32], strides = [1, 1]} : vector<5x32xf32> to vector<1x32xf32>
    %14 = vector.extract_strided_slice %11 {offsets = [2, 0], sizes = [1, 32], strides = [1, 1]} : vector<5x32xf32> to vector<1x32xf32>
    %15 = vector.extract_strided_slice %11 {offsets = [3, 0], sizes = [1, 32], strides = [1, 1]} : vector<5x32xf32> to vector<1x32xf32>
    %16 = vector.extract_strided_slice %11 {offsets = [4, 0], sizes = [1, 32], strides = [1, 1]} : vector<5x32xf32> to vector<1x32xf32>
    %17 = arith.truncf %0 : vector<16x8xf32> to vector<16x8xbf16>
    %cst_21 = arith.constant dense<0.000000e+00> : vector<16x128xf32>
    %18 = tpu.matmul %17, %7, %cst_21 {dimension_numbers = #tpu.dot_dimension_numbers<[1], [0], [0], [1], [0, 0, 1, 1], [], []>} : vector<16x8xbf16>, vector<8x128xbf16>, vector<16x128xf32> -> vector<16x128xf32>
    %19 = vector.broadcast %8 : vector<1x128xf32> to vector<16x128xf32>
    %20 = arith.addf %18, %19 : vector<16x128xf32>
    %21 = vector.extract_strided_slice %20 {offsets = [0, 96], sizes = [16, 32], strides = [1, 1]} : vector<16x128xf32> to vector<16x32xf32>
    %22 = arith.truncf %20 : vector<16x128xf32> to vector<16x128xbf16>
    %23 = vector.extract_strided_slice %22 {offsets = [0, 0], sizes = [16, 32], strides = [1, 1]} : vector<16x128xbf16> to vector<16x32xbf16>
    %cst_22 = arith.constant dense<0.000000e+00> : vector<32x32xf32>
    %24 = tpu.matmul %2, %23, %cst_22 {dimension_numbers = #tpu.dot_dimension_numbers<[1], [0], [0], [1], [0, 0, 1, 1], [], []>} : vector<32x16xbf16>, vector<16x32xbf16>, vector<32x32xf32> -> vector<32x32xf32>
    %25 = vector.extract_strided_slice %22 {offsets = [0, 32], sizes = [16, 64], strides = [1, 1]} : vector<16x128xbf16> to vector<16x64xbf16>
    %cst_23 = arith.constant dense<0.000000e+00> : vector<32x64xf32>
    %26 = tpu.matmul %1, %25, %cst_23 {dimension_numbers = #tpu.dot_dimension_numbers<[1], [0], [0], [1], [0, 0, 1, 1], [], []>} : vector<32x16xbf16>, vector<16x64xbf16>, vector<32x64xf32> -> vector<32x64xf32>
    %cst_24 = arith.constant dense<0.000000e+00> : vector<32x32xf32>
    %27 = tpu.matmul %4, %9, %cst_24 {dimension_numbers = #tpu.dot_dimension_numbers<[1], [0], [0], [1], [0, 0, 1, 1], [], []>} : vector<32x8xbf16>, vector<8x32xbf16>, vector<32x32xf32> -> vector<32x32xf32>
    %28 = vector.extract_strided_slice %26 {offsets = [0, 0], sizes = [32, 32], strides = [1, 1]} : vector<32x64xf32> to vector<32x32xf32>
    %29 = arith.addf %28, %27 : vector<32x32xf32>
    %30 = vector.extract_strided_slice %26 {offsets = [0, 32], sizes = [32, 32], strides = [1, 1]} : vector<32x64xf32> to vector<32x32xf32>
    %31 = arith.addf %30, %27 : vector<32x32xf32>
    %32 = arith.mulf %24, %29 : vector<32x32xf32>
    %cst_25 = arith.constant dense<0.000000e+00> : vector<32xf32>
    %33 = vector.multi_reduction <add>, %32, %cst_25 [1] : vector<32x32xf32> to vector<32xf32>
    %34 = vector.shape_cast %33 : vector<32xf32> to vector<32x1xf32>
    %cst_26 = arith.constant 0.176776692 : f32
    %35 = vector.broadcast %cst_26 : f32 to vector<32x1xf32>
    %36 = arith.mulf %34, %35 : vector<32x1xf32>
    %37 = vector.shape_cast %36 : vector<32x1xf32> to vector<1x32x1xf32>
    %cst_27 = arith.constant dense<0xFF800000> : vector<1xf32>
    %38 = vector.multi_reduction <maximumf>, %37, %cst_27 [1, 2] : vector<1x32x1xf32> to vector<1xf32>
    %39 = vector.shape_cast %38 : vector<1xf32> to vector<1x1x1xf32>
    %40 = vector.extract %39[0, 0, 0] : f32 from vector<1x1x1xf32>
    %41 = vector.broadcast %40 : f32 to vector<32x1xf32>
    %42 = arith.subf %36, %41 : vector<32x1xf32>
    %43 = math.exp %42 : vector<32x1xf32>
    %44 = vector.broadcast %43 : vector<32x1xf32> to vector<32x32xf32>
    %45 = arith.mulf %44, %31 : vector<32x32xf32>
    %46 = tpu.concatenate %45, %43 in 1 : vector<32x32xf32>, vector<32x1xf32> -> vector<32x33xf32>
    %47 = arith.truncf %46 : vector<32x33xf32> to vector<32x33xbf16>
    %cst_28 = arith.constant dense<0.000000e+00> : vector<16x33xf32>
    %48 = tpu.matmul %3, %47, %cst_28 {dimension_numbers = #tpu.dot_dimension_numbers<[1], [0], [0], [1], [0, 0, 1, 1], [], []>} : vector<16x32xbf16>, vector<32x33xbf16>, vector<16x33xf32> -> vector<16x33xf32>
    %49 = vector.extract_strided_slice %48 {offsets = [0, 32], sizes = [16, 1], strides = [1, 1]} : vector<16x33xf32> to vector<16x1xf32>
    %cst_29 = arith.constant 0.000000e+00 : f32
    %50 = vector.broadcast %cst_29 : f32 to vector<16x1xf32>
    %51 = arith.cmpf ogt, %49, %50 : vector<16x1xf32>
    %cst_30 = arith.constant 1.000000e+00 : f32
    %52 = vector.broadcast %cst_30 : f32 to vector<16x1xf32>
    %53 = arith.select %51, %49, %52 : vector<16x1xi1>, vector<16x1xf32>
    %54 = vector.extract_strided_slice %48 {offsets = [0, 0], sizes = [16, 32], strides = [1, 1]} : vector<16x33xf32> to vector<16x32xf32>
    %55 = tpu.reciprocal %53 {approx = true} : vector<16x1xf32> -> vector<16x1xf32>
    %56 = vector.broadcast %55 : vector<16x1xf32> to vector<16x32xf32>
    %57 = arith.mulf %54, %56 : vector<16x32xf32>
    %58 = vector.broadcast %15 : vector<1x32xf32> to vector<16x32xf32>
    %59 = arith.mulf %57, %58 : vector<16x32xf32>
    %60 = vector.broadcast %16 : vector<1x32xf32> to vector<16x32xf32>
    %61 = arith.mulf %21, %60 : vector<16x32xf32>
    %62 = arith.addf %59, %61 : vector<16x32xf32>
    %cst_31 = arith.constant dense<0.000000e+00> : vector<16xf32>
    %63 = vector.multi_reduction <add>, %62, %cst_31 [1] : vector<16x32xf32> to vector<16xf32>
    %64 = vector.shape_cast %63 : vector<16xf32> to vector<16x1xf32>
    %65 = arith.negf %64 : vector<16x1xf32>
    %66 = math.exp %65 : vector<16x1xf32>
    %cst_32 = arith.constant 1.000000e+00 : f32
    %67 = vector.broadcast %cst_32 : f32 to vector<16x1xf32>
    %68 = arith.addf %67, %66 : vector<16x1xf32>
    %69 = arith.divf %67, %68 : vector<16x1xf32>
    %70 = vector.broadcast %69 : vector<16x1xf32> to vector<16x32xf32>
    %71 = arith.mulf %70, %21 : vector<16x32xf32>
    %cst_33 = arith.constant 1.000000e+00 : f32
    %72 = vector.broadcast %cst_33 : f32 to vector<16x1xf32>
    %73 = arith.subf %72, %69 : vector<16x1xf32>
    %74 = vector.broadcast %73 : vector<16x1xf32> to vector<16x32xf32>
    %75 = arith.mulf %74, %57 : vector<16x32xf32>
    %76 = arith.addf %71, %75 : vector<16x32xf32>
    %77 = arith.truncf %76 : vector<16x32xf32> to vector<16x32xbf16>
    %cst_34 = arith.constant dense<0.000000e+00> : vector<16x32xf32>
    %78 = tpu.matmul %77, %10, %cst_34 {dimension_numbers = #tpu.dot_dimension_numbers<[1], [0], [0], [1], [0, 0, 1, 1], [], []>} : vector<16x32xbf16>, vector<32x32xbf16>, vector<16x32xf32> -> vector<16x32xf32>
    %79 = vector.broadcast %12 : vector<1x32xf32> to vector<16x32xf32>
    %80 = arith.addf %78, %79 : vector<16x32xf32>
    %cst_35 = arith.constant 0.000000e+00 : f32
    %81 = vector.broadcast %cst_35 : f32 to vector<16x32xf32>
    %82 = arith.maximumf %80, %81 : vector<16x32xf32>
    %83 = vector.broadcast %13 : vector<1x32xf32> to vector<16x32xf32>
    %84 = arith.mulf %82, %83 : vector<16x32xf32>
    %85 = vector.broadcast %14 : vector<1x32xf32> to vector<16x32xf32>
    %86 = arith.addf %84, %85 : vector<16x32xf32>
    %87 = arith.addf %6, %86 : vector<16x32xf32>
    %c0_36 = arith.constant 0 : index
    %c0_37 = arith.constant 0 : index
    %88 = vector.load %arg11[%c0_36, %c0_37] : memref<32x128xbf16, #tpu.memory_space<vmem>>, vector<32x128xbf16>
    %c0_38 = arith.constant 0 : index
    %c0_39 = arith.constant 0 : index
    %89 = vector.load %arg12[%c0_38, %c0_39] : memref<1x128xf32, #tpu.memory_space<vmem>>, vector<1x128xf32>
    %c0_40 = arith.constant 0 : index
    %c0_41 = arith.constant 0 : index
    %90 = vector.load %arg13[%c0_40, %c0_41] : memref<8x32xbf16, #tpu.memory_space<vmem>>, vector<8x32xbf16>
    %c0_42 = arith.constant 0 : index
    %c0_43 = arith.constant 0 : index
    %91 = vector.load %arg14[%c0_42, %c0_43] : memref<32x32xbf16, #tpu.memory_space<vmem>>, vector<32x32xbf16>
    %c0_44 = arith.constant 0 : index
    %c0_45 = arith.constant 0 : index
    %92 = vector.load %arg15[%c0_44, %c0_45] : memref<5x32xf32, #tpu.memory_space<vmem>>, vector<5x32xf32>
    %93 = vector.extract_strided_slice %92 {offsets = [0, 0], sizes = [1, 32], strides = [1, 1]} : vector<5x32xf32> to vector<1x32xf32>
    %94 = vector.extract_strided_slice %92 {offsets = [1, 0], sizes = [1, 32], strides = [1, 1]} : vector<5x32xf32> to vector<1x32xf32>
    %95 = vector.extract_strided_slice %92 {offsets = [2, 0], sizes = [1, 32], strides = [1, 1]} : vector<5x32xf32> to vector<1x32xf32>
    %96 = vector.extract_strided_slice %92 {offsets = [3, 0], sizes = [1, 32], strides = [1, 1]} : vector<5x32xf32> to vector<1x32xf32>
    %97 = vector.extract_strided_slice %92 {offsets = [4, 0], sizes = [1, 32], strides = [1, 1]} : vector<5x32xf32> to vector<1x32xf32>
    %98 = arith.truncf %86 : vector<16x32xf32> to vector<16x32xbf16>
    %cst_46 = arith.constant dense<0.000000e+00> : vector<16x128xf32>
    %99 = tpu.matmul %98, %88, %cst_46 {dimension_numbers = #tpu.dot_dimension_numbers<[1], [0], [0], [1], [0, 0, 1, 1], [], []>} : vector<16x32xbf16>, vector<32x128xbf16>, vector<16x128xf32> -> vector<16x128xf32>
    %100 = vector.broadcast %89 : vector<1x128xf32> to vector<16x128xf32>
    %101 = arith.addf %99, %100 : vector<16x128xf32>
    %102 = vector.extract_strided_slice %101 {offsets = [0, 96], sizes = [16, 32], strides = [1, 1]} : vector<16x128xf32> to vector<16x32xf32>
    %103 = arith.truncf %101 : vector<16x128xf32> to vector<16x128xbf16>
    %104 = vector.extract_strided_slice %103 {offsets = [0, 0], sizes = [16, 32], strides = [1, 1]} : vector<16x128xbf16> to vector<16x32xbf16>
    %cst_47 = arith.constant dense<0.000000e+00> : vector<32x32xf32>
    %105 = tpu.matmul %2, %104, %cst_47 {dimension_numbers = #tpu.dot_dimension_numbers<[1], [0], [0], [1], [0, 0, 1, 1], [], []>} : vector<32x16xbf16>, vector<16x32xbf16>, vector<32x32xf32> -> vector<32x32xf32>
    %106 = vector.extract_strided_slice %103 {offsets = [0, 32], sizes = [16, 64], strides = [1, 1]} : vector<16x128xbf16> to vector<16x64xbf16>
    %cst_48 = arith.constant dense<0.000000e+00> : vector<32x64xf32>
    %107 = tpu.matmul %1, %106, %cst_48 {dimension_numbers = #tpu.dot_dimension_numbers<[1], [0], [0], [1], [0, 0, 1, 1], [], []>} : vector<32x16xbf16>, vector<16x64xbf16>, vector<32x64xf32> -> vector<32x64xf32>
    %cst_49 = arith.constant dense<0.000000e+00> : vector<32x32xf32>
    %108 = tpu.matmul %4, %90, %cst_49 {dimension_numbers = #tpu.dot_dimension_numbers<[1], [0], [0], [1], [0, 0, 1, 1], [], []>} : vector<32x8xbf16>, vector<8x32xbf16>, vector<32x32xf32> -> vector<32x32xf32>
    %109 = vector.extract_strided_slice %107 {offsets = [0, 0], sizes = [32, 32], strides = [1, 1]} : vector<32x64xf32> to vector<32x32xf32>
    %110 = arith.addf %109, %108 : vector<32x32xf32>
    %111 = vector.extract_strided_slice %107 {offsets = [0, 32], sizes = [32, 32], strides = [1, 1]} : vector<32x64xf32> to vector<32x32xf32>
    %112 = arith.addf %111, %108 : vector<32x32xf32>
    %113 = arith.mulf %105, %110 : vector<32x32xf32>
    %cst_50 = arith.constant dense<0.000000e+00> : vector<32xf32>
    %114 = vector.multi_reduction <add>, %113, %cst_50 [1] : vector<32x32xf32> to vector<32xf32>
    %115 = vector.shape_cast %114 : vector<32xf32> to vector<32x1xf32>
    %cst_51 = arith.constant 0.176776692 : f32
    %116 = vector.broadcast %cst_51 : f32 to vector<32x1xf32>
    %117 = arith.mulf %115, %116 : vector<32x1xf32>
    %118 = vector.shape_cast %117 : vector<32x1xf32> to vector<1x32x1xf32>
    %cst_52 = arith.constant dense<0xFF800000> : vector<1xf32>
    %119 = vector.multi_reduction <maximumf>, %118, %cst_52 [1, 2] : vector<1x32x1xf32> to vector<1xf32>
    %120 = vector.shape_cast %119 : vector<1xf32> to vector<1x1x1xf32>
    %121 = vector.extract %120[0, 0, 0] : f32 from vector<1x1x1xf32>
    %122 = vector.broadcast %121 : f32 to vector<32x1xf32>
    %123 = arith.subf %117, %122 : vector<32x1xf32>
    %124 = math.exp %123 : vector<32x1xf32>
    %125 = vector.broadcast %124 : vector<32x1xf32> to vector<32x32xf32>
    %126 = arith.mulf %125, %112 : vector<32x32xf32>
    %127 = tpu.concatenate %126, %124 in 1 : vector<32x32xf32>, vector<32x1xf32> -> vector<32x33xf32>
    %128 = arith.truncf %127 : vector<32x33xf32> to vector<32x33xbf16>
    %cst_53 = arith.constant dense<0.000000e+00> : vector<16x33xf32>
    %129 = tpu.matmul %3, %128, %cst_53 {dimension_numbers = #tpu.dot_dimension_numbers<[1], [0], [0], [1], [0, 0, 1, 1], [], []>} : vector<16x32xbf16>, vector<32x33xbf16>, vector<16x33xf32> -> vector<16x33xf32>
    %130 = vector.extract_strided_slice %129 {offsets = [0, 32], sizes = [16, 1], strides = [1, 1]} : vector<16x33xf32> to vector<16x1xf32>
    %cst_54 = arith.constant 0.000000e+00 : f32
    %131 = vector.broadcast %cst_54 : f32 to vector<16x1xf32>
    %132 = arith.cmpf ogt, %130, %131 : vector<16x1xf32>
    %cst_55 = arith.constant 1.000000e+00 : f32
    %133 = vector.broadcast %cst_55 : f32 to vector<16x1xf32>
    %134 = arith.select %132, %130, %133 : vector<16x1xi1>, vector<16x1xf32>
    %135 = vector.extract_strided_slice %129 {offsets = [0, 0], sizes = [16, 32], strides = [1, 1]} : vector<16x33xf32> to vector<16x32xf32>
    %136 = tpu.reciprocal %134 {approx = true} : vector<16x1xf32> -> vector<16x1xf32>
    %137 = vector.broadcast %136 : vector<16x1xf32> to vector<16x32xf32>
    %138 = arith.mulf %135, %137 : vector<16x32xf32>
    %139 = vector.broadcast %96 : vector<1x32xf32> to vector<16x32xf32>
    %140 = arith.mulf %138, %139 : vector<16x32xf32>
    %141 = vector.broadcast %97 : vector<1x32xf32> to vector<16x32xf32>
    %142 = arith.mulf %102, %141 : vector<16x32xf32>
    %143 = arith.addf %140, %142 : vector<16x32xf32>
    %cst_56 = arith.constant dense<0.000000e+00> : vector<16xf32>
    %144 = vector.multi_reduction <add>, %143, %cst_56 [1] : vector<16x32xf32> to vector<16xf32>
    %145 = vector.shape_cast %144 : vector<16xf32> to vector<16x1xf32>
    %146 = arith.negf %145 : vector<16x1xf32>
    %147 = math.exp %146 : vector<16x1xf32>
    %cst_57 = arith.constant 1.000000e+00 : f32
    %148 = vector.broadcast %cst_57 : f32 to vector<16x1xf32>
    %149 = arith.addf %148, %147 : vector<16x1xf32>
    %150 = arith.divf %148, %149 : vector<16x1xf32>
    %151 = vector.broadcast %150 : vector<16x1xf32> to vector<16x32xf32>
    %152 = arith.mulf %151, %102 : vector<16x32xf32>
    %cst_58 = arith.constant 1.000000e+00 : f32
    %153 = vector.broadcast %cst_58 : f32 to vector<16x1xf32>
    %154 = arith.subf %153, %150 : vector<16x1xf32>
    %155 = vector.broadcast %154 : vector<16x1xf32> to vector<16x32xf32>
    %156 = arith.mulf %155, %138 : vector<16x32xf32>
    %157 = arith.addf %152, %156 : vector<16x32xf32>
    %158 = arith.truncf %157 : vector<16x32xf32> to vector<16x32xbf16>
    %cst_59 = arith.constant dense<0.000000e+00> : vector<16x32xf32>
    %159 = tpu.matmul %158, %91, %cst_59 {dimension_numbers = #tpu.dot_dimension_numbers<[1], [0], [0], [1], [0, 0, 1, 1], [], []>} : vector<16x32xbf16>, vector<32x32xbf16>, vector<16x32xf32> -> vector<16x32xf32>
    %160 = vector.broadcast %93 : vector<1x32xf32> to vector<16x32xf32>
    %161 = arith.addf %159, %160 : vector<16x32xf32>
    %cst_60 = arith.constant 0.000000e+00 : f32
    %162 = vector.broadcast %cst_60 : f32 to vector<16x32xf32>
    %163 = arith.maximumf %161, %162 : vector<16x32xf32>
    %164 = vector.broadcast %94 : vector<1x32xf32> to vector<16x32xf32>
    %165 = arith.mulf %163, %164 : vector<16x32xf32>
    %166 = vector.broadcast %95 : vector<1x32xf32> to vector<16x32xf32>
    %167 = arith.addf %165, %166 : vector<16x32xf32>
    %168 = arith.addf %87, %167 : vector<16x32xf32>
    %c0_61 = arith.constant 0 : index
    %c0_62 = arith.constant 0 : index
    %169 = vector.load %arg16[%c0_61, %c0_62] : memref<1x32xf32, #tpu.memory_space<vmem>>, vector<1x32xf32>
    %c0_63 = arith.constant 0 : index
    %c0_64 = arith.constant 0 : index
    %170 = vector.load %arg17[%c0_63, %c0_64] : memref<1x1xf32, #tpu.memory_space<vmem>>, vector<1x1xf32>
    %c0_65 = arith.constant 0 : index
    %c0_66 = arith.constant 0 : index
    %171 = vector.load %arg18[%c0_65, %c0_66] : memref<32x16xbf16, #tpu.memory_space<vmem>>, vector<32x16xbf16>
    %c0_67 = arith.constant 0 : index
    %c0_68 = arith.constant 0 : index
    %172 = vector.load %arg19[%c0_67, %c0_68] : memref<1x16xf32, #tpu.memory_space<vmem>>, vector<1x16xf32>
    %c0_69 = arith.constant 0 : index
    %c0_70 = arith.constant 0 : index
    %173 = vector.load %arg20[%c0_69, %c0_70] : memref<16x4xbf16, #tpu.memory_space<vmem>>, vector<16x4xbf16>
    %c0_71 = arith.constant 0 : index
    %c0_72 = arith.constant 0 : index
    %174 = vector.load %arg21[%c0_71, %c0_72] : memref<1x4xf32, #tpu.memory_space<vmem>>, vector<1x4xf32>
    %175 = vector.broadcast %169 : vector<1x32xf32> to vector<16x32xf32>
    %176 = arith.mulf %168, %175 : vector<16x32xf32>
    %cst_73 = arith.constant dense<0.000000e+00> : vector<16xf32>
    %177 = vector.multi_reduction <add>, %176, %cst_73 [1] : vector<16x32xf32> to vector<16xf32>
    %178 = vector.shape_cast %177 : vector<16xf32> to vector<16x1xf32>
    %179 = vector.broadcast %170 : vector<1x1xf32> to vector<16x1xf32>
    %180 = arith.addf %178, %179 : vector<16x1xf32>
    %181 = vector.shape_cast %180 : vector<16x1xf32> to vector<1x16x1xf32>
    %cst_74 = arith.constant dense<0xFF800000> : vector<1xf32>
    %182 = vector.multi_reduction <maximumf>, %181, %cst_74 [1, 2] : vector<1x16x1xf32> to vector<1xf32>
    %183 = vector.shape_cast %182 : vector<1xf32> to vector<1x1x1xf32>
    %184 = vector.extract %183[0, 0, 0] : f32 from vector<1x1x1xf32>
    %185 = vector.broadcast %184 : f32 to vector<16x1xf32>
    %186 = arith.subf %180, %185 : vector<16x1xf32>
    %187 = math.exp %186 : vector<16x1xf32>
    %188 = vector.broadcast %187 : vector<16x1xf32> to vector<16x32xf32>
    %189 = arith.mulf %188, %168 : vector<16x32xf32>
    %190 = tpu.concatenate %189, %187 in 1 : vector<16x32xf32>, vector<16x1xf32> -> vector<16x33xf32>
    %191 = arith.truncf %190 : vector<16x33xf32> to vector<16x33xbf16>
    %cst_75 = arith.constant dense<0.000000e+00> : vector<2x33xf32>
    %192 = tpu.matmul %5, %191, %cst_75 {dimension_numbers = #tpu.dot_dimension_numbers<[1], [0], [0], [1], [0, 0, 1, 1], [], []>} : vector<2x16xbf16>, vector<16x33xbf16>, vector<2x33xf32> -> vector<2x33xf32>
    %193 = vector.extract_strided_slice %192 {offsets = [0, 32], sizes = [2, 1], strides = [1, 1]} : vector<2x33xf32> to vector<2x1xf32>
    %cst_76 = arith.constant 0.000000e+00 : f32
    %194 = vector.broadcast %cst_76 : f32 to vector<2x1xf32>
    %195 = arith.cmpf ogt, %193, %194 : vector<2x1xf32>
    %cst_77 = arith.constant 1.000000e+00 : f32
    %196 = vector.broadcast %cst_77 : f32 to vector<2x1xf32>
    %197 = arith.select %195, %193, %196 : vector<2x1xi1>, vector<2x1xf32>
    %198 = vector.extract_strided_slice %192 {offsets = [0, 0], sizes = [2, 32], strides = [1, 1]} : vector<2x33xf32> to vector<2x32xf32>
    %199 = tpu.reciprocal %197 {approx = true} : vector<2x1xf32> -> vector<2x1xf32>
    %200 = vector.broadcast %199 : vector<2x1xf32> to vector<2x32xf32>
    %201 = arith.mulf %198, %200 : vector<2x32xf32>
    %202 = arith.truncf %201 : vector<2x32xf32> to vector<2x32xbf16>
    %cst_78 = arith.constant dense<0.000000e+00> : vector<2x16xf32>
    %203 = tpu.matmul %202, %171, %cst_78 {dimension_numbers = #tpu.dot_dimension_numbers<[1], [0], [0], [1], [0, 0, 1, 1], [], []>} : vector<2x32xbf16>, vector<32x16xbf16>, vector<2x16xf32> -> vector<2x16xf32>
    %204 = vector.broadcast %172 : vector<1x16xf32> to vector<2x16xf32>
    %205 = arith.addf %203, %204 : vector<2x16xf32>
    %cst_79 = arith.constant 0.000000e+00 : f32
    %206 = vector.broadcast %cst_79 : f32 to vector<2x16xf32>
    %207 = arith.maximumf %205, %206 : vector<2x16xf32>
    %208 = arith.truncf %207 : vector<2x16xf32> to vector<2x16xbf16>
    %cst_80 = arith.constant dense<0.000000e+00> : vector<2x4xf32>
    %209 = tpu.matmul %208, %173, %cst_80 {dimension_numbers = #tpu.dot_dimension_numbers<[1], [0], [0], [1], [0, 0, 1, 1], [], []>} : vector<2x16xbf16>, vector<16x4xbf16>, vector<2x4xf32> -> vector<2x4xf32>
    %210 = vector.broadcast %174 : vector<1x4xf32> to vector<2x4xf32>
    %211 = arith.addf %209, %210 : vector<2x4xf32>
    %c0_81 = arith.constant 0 : index
    %c0_82 = arith.constant 0 : index
    %212 = vector.load %arg22[%c0_81, %c0_82] : memref<2x4xf32, #tpu.memory_space<vmem>>, vector<2x4xf32>
    tpu.vector_store %arg22[%c0_81, %c0_82], %211 {strides = array<i32>} : memref<2x4xf32, #tpu.memory_space<vmem>>, vector<2x4xf32>,
    return
  }
}

</mosaic_0001>

<llo_original>
// kernel: tpu_custom_call.1
$region0: #{tpu_custom_call.1}
  #allocation0 [shape = 'u32[]', space=smem, size = 0x4, offset = 0x4, fixed_abs, tag = 'smem constant byte address 0x4 - core index']
  #allocation1 [shape = 'u32[144,128]{1,0:T(1,128)}', space=vmem, size = 0x12000, scoped, tag = 'internal scratch']
  #allocation2 [shape = 'f32[1,1]{1,0:T(1,128)S(1)}', space=vmem, size = 0x200, scoped, tag = 'scoped memory for tpu_custom_call.1']
  %s0 = inlined_call_operand.vmem [shape: f32[16,8], index: 0, kind: input, shape index: {}]
  %s1 = inlined_call_operand.vmem [shape: bf16[32,16], index: 1, kind: input, shape index: {}]
  %s2 = inlined_call_operand.vmem [shape: bf16[32,16], index: 2, kind: input, shape index: {}]
  %s3 = inlined_call_operand.vmem [shape: bf16[16,32], index: 3, kind: input, shape index: {}]
  %s4 = inlined_call_operand.vmem [shape: bf16[32,8], index: 4, kind: input, shape index: {}]
  %s5 = inlined_call_operand.vmem [shape: bf16[2,16], index: 5, kind: input, shape index: {}]
  %s6 = inlined_call_operand.vmem [shape: bf16[8,128], index: 6, kind: input, shape index: {}]
  %s7 = inlined_call_operand.vmem [shape: f32[1,128], index: 7, kind: input, shape index: {}]
  %s8 = inlined_call_operand.vmem [shape: bf16[8,32], index: 8, kind: input, shape index: {}]
  %s9 = inlined_call_operand.vmem [shape: bf16[32,32], index: 9, kind: input, shape index: {}]
  %s10 = inlined_call_operand.vmem [shape: f32[5,32], index: 10, kind: input, shape index: {}]
  %s11 = inlined_call_operand.vmem [shape: bf16[32,128], index: 11, kind: input, shape index: {}]
  %s12 = inlined_call_operand.vmem [shape: f32[1,128], index: 12, kind: input, shape index: {}]
  %s13 = inlined_call_operand.vmem [shape: bf16[8,32], index: 13, kind: input, shape index: {}]
  %s14 = inlined_call_operand.vmem [shape: bf16[32,32], index: 14, kind: input, shape index: {}]
  %s15 = inlined_call_operand.vmem [shape: f32[5,32], index: 15, kind: input, shape index: {}]
  %s16 = inlined_call_operand.vmem [shape: f32[1,32], index: 16, kind: input, shape index: {}]
  %s17 = inlined_call_operand.<no memory space> [shape: f32[1,1], index: 17, kind: input, shape index: {}]
  %s18 = inlined_call_operand.vmem [shape: bf16[32,16], index: 18, kind: input, shape index: {}]
  %s19 = inlined_call_operand.vmem [shape: f32[1,16], index: 19, kind: input, shape index: {}]
  %s20 = inlined_call_operand.vmem [shape: bf16[16,4], index: 20, kind: input, shape index: {}]
  %s21 = inlined_call_operand.vmem [shape: f32[1,4], index: 21, kind: input, shape index: {}]
  %s22 = inlined_call_operand.hbm [shape: f32[2,4], index: 22, kind: output, shape index: {}]
  %s23 = sld [smem:[#allocation0]]
  $region98: #{tpu_custom_call.1} parent=0
    _
  %s25 = ssub.s32 1, %s23
  %s26 = scalar_select 0, %s25, %s23
  %v27 = vstv %s17
  %28 = vst [vmem:[#allocation2] sm:$0x1] %v27
  $region1: #{tpu_custom_call.1} parent=0
    #allocation3 [shape = 'u8[1024]{0}', space=vmem, size = 0x400, scoped, tag = 'output window, operand 0, single buffered']
    #allocation4 [shape = 's32[1]{0}', space=sflag, size = 0x4, scoped, tag = 'scoped memory for tpu_custom_call.1']
    %29 = vsyncpa [#allocation4], 0
    // Predicated region
    $region2: #{tpu_custom_call.1} parent=1 // pred_check
      _
    $region3: #{tpu_custom_call.1} parent=1 // pred_check_branch
      %31 = sbr.rel (0) target = $region5
    $region4: #{tpu_custom_call.1} parent=1 // pred_region
      _
    $region5: #{tpu_custom_call.1} parent=1 // pred_fallthru
      _
    // Predicated region
    $region6: #{tpu_custom_call.1} parent=1 // pred_check
      _
    $region7: #{tpu_custom_call.1} parent=1 // pred_check_branch
      %33 = sbr.rel (0) target = $region9
    $region8: #{tpu_custom_call.1} parent=1 // pred_region
      _
    $region9: #{tpu_custom_call.1} parent=1 // pred_fallthru
      _
    // Predicated region
    $region10: #{tpu_custom_call.1} parent=1 // pred_check
      _
    $region11: #{tpu_custom_call.1} parent=1 // pred_check_branch
      %35 = sbr.rel (0) target = $region13
    $region12: #{tpu_custom_call.1} parent=1 // pred_region
      _
    $region13: #{tpu_custom_call.1} parent=1 // pred_fallthru
      _
    // Predicated region
    $region14: #{tpu_custom_call.1} parent=1 // pred_check
      _
    $region15: #{tpu_custom_call.1} parent=1 // pred_check_branch
      %37 = sbr.rel (0) target = $region17
    $region16: #{tpu_custom_call.1} parent=1 // pred_region
      _
    $region17: #{tpu_custom_call.1} parent=1 // pred_fallthru
      _
    // Predicated region
    $region18: #{tpu_custom_call.1} parent=1 // pred_check
      _
    $region19: #{tpu_custom_call.1} parent=1 // pred_check_branch
      %39 = sbr.rel (0) target = $region21
    $region20: #{tpu_custom_call.1} parent=1 // pred_region
      _
    $region21: #{tpu_custom_call.1} parent=1 // pred_fallthru
      _
    // Predicated region
    $region22: #{tpu_custom_call.1} parent=1 // pred_check
      _
    $region23: #{tpu_custom_call.1} parent=1 // pred_check_branch
      %41 = sbr.rel (0) target = $region25
    $region24: #{tpu_custom_call.1} parent=1 // pred_region
      _
    $region25: #{tpu_custom_call.1} parent=1 // pred_fallthru
      _
    // Predicated region
    $region26: #{tpu_custom_call.1} parent=1 // pred_check
      _
    $region27: #{tpu_custom_call.1} parent=1 // pred_check_branch
      %43 = sbr.rel (0) target = $region29
    $region28: #{tpu_custom_call.1} parent=1 // pred_region
      _
    $region29: #{tpu_custom_call.1} parent=1 // pred_fallthru
      _
    // Predicated region
    $region30: #{tpu_custom_call.1} parent=1 // pred_check
      _
    $region31: #{tpu_custom_call.1} parent=1 // pred_check_branch
      %45 = sbr.rel (0) target = $region33
    $region32: #{tpu_custom_call.1} parent=1 // pred_region
      _
    $region33: #{tpu_custom_call.1} parent=1 // pred_fallthru
      _
    // Predicated region
    $region34: #{tpu_custom_call.1} parent=1 // pred_check
      _
    $region35: #{tpu_custom_call.1} parent=1 // pred_check_branch
      %47 = sbr.rel (0) target = $region37
    $region36: #{tpu_custom_call.1} parent=1 // pred_region
      _
    $region37: #{tpu_custom_call.1} parent=1 // pred_fallthru
      _
    // Predicated region
    $region38: #{tpu_custom_call.1} parent=1 // pred_check
      _
    $region39: #{tpu_custom_call.1} parent=1 // pred_check_branch
      %49 = sbr.rel (0) target = $region41
    $region40: #{tpu_custom_call.1} parent=1 // pred_region
      _
    $region41: #{tpu_custom_call.1} parent=1 // pred_fallthru
      _
    // Predicated region
    $region42: #{tpu_custom_call.1} parent=1 // pred_check
      _
    $region43: #{tpu_custom_call.1} parent=1 // pred_check_branch
      %51 = sbr.rel (0) target = $region45
    $region44: #{tpu_custom_call.1} parent=1 // pred_region
      _
    $region45: #{tpu_custom_call.1} parent=1 // pred_fallthru
      _
    // Predicated region
    $region46: #{tpu_custom_call.1} parent=1 // pred_check
      _
    $region47: #{tpu_custom_call.1} parent=1 // pred_check_branch
      %53 = sbr.rel (0) target = $region49
    $region48: #{tpu_custom_call.1} parent=1 // pred_region
      _
    $region49: #{tpu_custom_call.1} parent=1 // pred_fallthru
      _
    // Predicated region
    $region50: #{tpu_custom_call.1} parent=1 // pred_check
      _
    $region51: #{tpu_custom_call.1} parent=1 // pred_check_branch
      %55 = sbr.rel (0) target = $region53
    $region52: #{tpu_custom_call.1} parent=1 // pred_region
      _
    $region53: #{tpu_custom_call.1} parent=1 // pred_fallthru
      _
    // Predicated region
    $region54: #{tpu_custom_call.1} parent=1 // pred_check
      _
    $region55: #{tpu_custom_call.1} parent=1 // pred_check_branch
      %57 = sbr.rel (0) target = $region57
    $region56: #{tpu_custom_call.1} parent=1 // pred_region
      _
    $region57: #{tpu_custom_call.1} parent=1 // pred_fallthru
      _
    // Predicated region
    $region58: #{tpu_custom_call.1} parent=1 // pred_check
      _
    $region59: #{tpu_custom_call.1} parent=1 // pred_check_branch
      %59 = sbr.rel (0) target = $region61
    $region60: #{tpu_custom_call.1} parent=1 // pred_region
      _
    $region61: #{tpu_custom_call.1} parent=1 // pred_fallthru
      _
    // Predicated region
    $region62: #{tpu_custom_call.1} parent=1 // pred_check
      _
    $region63: #{tpu_custom_call.1} parent=1 // pred_check_branch
      %61 = sbr.rel (0) target = $region65
    $region64: #{tpu_custom_call.1} parent=1 // pred_region
      _
    $region65: #{tpu_custom_call.1} parent=1 // pred_fallthru
      _
    // Predicated region
    $region66: #{tpu_custom_call.1} parent=1 // pred_check
      _
    $region67: #{tpu_custom_call.1} parent=1 // pred_check_branch
      %63 = sbr.rel (0) target = $region69
    $region68: #{tpu_custom_call.1} parent=1 // pred_region
      _
    $region69: #{tpu_custom_call.1} parent=1 // pred_fallthru
      _
    // Predicated region
    $region70: #{tpu_custom_call.1} parent=1 // pred_check
      _
    $region71: #{tpu_custom_call.1} parent=1 // pred_check_branch
      %65 = sbr.rel (0) target = $region73
    $region72: #{tpu_custom_call.1} parent=1 // pred_region
      _
    $region73: #{tpu_custom_call.1} parent=1 // pred_fallthru
      _
    // Predicated region
    $region74: #{tpu_custom_call.1} parent=1 // pred_check
      _
    $region75: #{tpu_custom_call.1} parent=1 // pred_check_branch
      %67 = sbr.rel (0) target = $region77
    $region76: #{tpu_custom_call.1} parent=1 // pred_region
      _
    $region77: #{tpu_custom_call.1} parent=1 // pred_fallthru
      _
    // Predicated region
    $region78: #{tpu_custom_call.1} parent=1 // pred_check
      _
    $region79: #{tpu_custom_call.1} parent=1 // pred_check_branch
      %69 = sbr.rel (0) target = $region81
    $region80: #{tpu_custom_call.1} parent=1 // pred_region
      _
    $region81: #{tpu_custom_call.1} parent=1 // pred_fallthru
      _
    // Predicated region
    $region82: #{tpu_custom_call.1} parent=1 // pred_check
      _
    $region83: #{tpu_custom_call.1} parent=1 // pred_check_branch
      %71 = sbr.rel (0) target = $region85
    $region84: #{tpu_custom_call.1} parent=1 // pred_region
      _
    $region85: #{tpu_custom_call.1} parent=1 // pred_fallthru
      _
    // Predicated region
    $region86: #{tpu_custom_call.1} parent=1 // pred_check
      _
    $region87: #{tpu_custom_call.1} parent=1 // pred_check_branch
      %73 = sbr.rel (0) target = $region89
    $region88: #{tpu_custom_call.1} parent=1 // pred_region
      _
    $region89: #{tpu_custom_call.1} parent=1 // pred_fallthru
      _
    %v75 = vld [vmem:[%s0] sm:$0xff]
    %v76 = vld [vmem:[%s0 + $0x8] sm:$0xff]
    %v77 = vld [vmem:[%s1] sm:$0xf]
    %v78 = vld [vmem:[%s1 + $0x4] sm:$0xf]
    %v79 = vld [vmem:[%s1 + $0x8] sm:$0xf]
    %v80 = vld [vmem:[%s1 + $0xc] sm:$0xf]
    %v81 = vld [vmem:[%s2] sm:$0xf]
    %v82 = vld [vmem:[%s2 + $0x4] sm:$0xf]
    %v83 = vld [vmem:[%s2 + $0x8] sm:$0xf]
    %v84 = vld [vmem:[%s2 + $0xc] sm:$0xf]
    %v85 = vld [vmem:[%s3] sm:$0xf]
    %v86 = vld [vmem:[%s3 + $0x4] sm:$0xf]
    %v87 = vld [vmem:[%s4] sm:$0xf]
    %v88 = vld [vmem:[%s4 + $0x4] sm:$0xf]
    %v89 = vld [vmem:[%s4 + $0x8] sm:$0xf]
    %v90 = vld [vmem:[%s4 + $0xc] sm:$0xf]
    %v91 = vld [vmem:[%s5] sm:$0x1]
    %v92 = vld [vmem:[%s6] sm:$0xf]
    %v93 = vld [vmem:[%s7] sm:$0x1]
    %v94 = vld [vmem:[%s8] sm:$0xf]
    %v95 = vld [vmem:[%s9] sm:$0xf]
    %v96 = vld [vmem:[%s9 + $0x4] sm:$0xf]
    %v97 = vld [vmem:[%s9 + $0x8] sm:$0xf]
    %v98 = vld [vmem:[%s9 + $0xc] sm:$0xf]
    %v99 = vld [vmem:[%s10] sm:$0x1f]
    %v100 = vpack.c.bf16 %v76, %v75
    %v102 = vlaneseq
    %v103 = vshrl.u32 %v102, 7
    %v104 = vsub.s32 0, %v103
    %v105 = vrot.slane %v93, %v104
    %vm107 = vcmask 64512
    %v109 = vsel %vm107, %v100, 0
    %vm111 = vcmask 1043456
    %v113 = vsel %vm111, %v92, 0
    %115 = vmatprep.subr.bf16.mxu0 0
    %116 = vmatpush1.bf16.msra.mxu0 0
    %117 = vmatprep.subr.bf16.mxu0 0
    %118 = vmatpush1.bf16.msra.mxu0 0
    %119 = vmatprep.subr.bf16.mxu0 0
    %120 = vmatpush1.bf16.msra.mxu0 0
    %121 = vmatprep.subr.bf16.mxu0 0
    %122 = vmatpush1.bf16.msra.mxu0 0
    %123 = vmatprep.subr.bf16.mxu0 0
    %124 = vmatpush1.bf16.msra.mxu0 0
    %125 = vmatprep.subr.bf16.mxu0 0
    %126 = vmatpush1.bf16.msra.mxu0 0
    %127 = vmatprep.subr.bf16.mxu0 0
    %128 = vmatpush1.bf16.msra.mxu0 0
    %129 = vmatprep.subr.bf16.mxu0 0
    %130 = vmatpush1.bf16.msra.mxu0 %v113
    %131 = vmatprep.subr.bf16.mxu0 0
    %132 = vmatpush2.bf16.msra.mxu0 0
    %133 = vmatprep.subr.bf16.mxu0 0
    %134 = vmatpush2.bf16.msra.mxu0 0
    %135 = vmatprep.subr.bf16.mxu0 0
    %136 = vmatpush2.bf16.msra.mxu0 0
    %137 = vmatprep.subr.bf16.mxu0 0
    %138 = vmatpush2.bf16.msra.mxu0 0
    %139 = vmatprep.subr.bf16.mxu0 0
    %140 = vmatpush2.bf16.msra.mxu0 0
    %141 = vmatprep.subr.bf16.mxu0 0
    %142 = vmatpush2.bf16.msra.mxu0 0
    %143 = vmatprep.subr.bf16.mxu0 0
    %144 = vmatpush2.bf16.msra.mxu0 0
    %145 = vmatprep.subr.bf16.mxu0 0
    %146 = vmatpush2.bf16.msra.mxu0 0
    %147 = vmatprep.mubr.bf16.mxu0 0
    %148 = vmatmul.mubr.bf16.gmra.mxu0 %v109
    %v149 = vpop.f32.mrf.mxu0
    %v150 = vadd.f32 %v105, %v149
    %v151 = vpop.f32.mrf.mxu0
    %v152 = vpop.f32.mrf.mxu0
    %v153 = vadd.f32 %v105, %v152
    %v154 = vpop.f32.mrf.mxu0
    %155 = vdwg.mxu0
    %v156 = vpack.c.bf16 %v153, %v150
    %v161 = vunpack.c.l.b16 %v81
    %v162 = vunpack.c.l.b16 %v82
    %v163 = vunpack.c.l.b16 %v83
    %v164 = vunpack.c.l.b16 %v84
    %v165 = vpack.c.b16 %v162, %v161
    %v166 = vpack.c.b16 %v164, %v163
    %vm167 = vcmask 130048
    %v169 = vsel %vm167, %v165, 0
    %v172 = vsel %vm167, %v166, 0
    %174 = vmatprep.subr.bf16.mxu0 0
    %175 = vmatpush1.bf16.msra.mxu0 0
    %176 = vmatprep.subr.bf16.mxu0 0
    %177 = vmatpush1.bf16.msra.mxu0 0
    %178 = vmatprep.subr.bf16.mxu0 0
    %179 = vmatpush1.bf16.msra.mxu0 0
    %180 = vmatprep.subr.bf16.mxu0 0
    %181 = vmatpush1.bf16.msra.mxu0 0
    %182 = vmatprep.subr.bf16.mxu0 0
    %183 = vmatpush1.bf16.msra.mxu0 0
    %184 = vmatprep.subr.bf16.mxu0 0
    %185 = vmatpush1.bf16.msra.mxu0 0
    %186 = vmatprep.subr.bf16.mxu0 0
    %187 = vmatpush1.bf16.msra.mxu0 0
    %188 = vmatprep.subr.bf16.mxu0 0
    %189 = vmatpush1.bf16.msra.mxu0 %v156
    %190 = vmatprep.subr.bf16.mxu0 0
    %191 = vmatpush2.bf16.msra.mxu0 0
    %192 = vmatprep.subr.bf16.mxu0 0
    %193 = vmatpush2.bf16.msra.mxu0 0
    %194 = vmatprep.subr.bf16.mxu0 0
    %195 = vmatpush2.bf16.msra.mxu0 0
    %196 = vmatprep.subr.bf16.mxu0 0
    %197 = vmatpush2.bf16.msra.mxu0 0
    %198 = vmatprep.subr.bf16.mxu0 0
    %199 = vmatpush2.bf16.msra.mxu0 0
    %200 = vmatprep.subr.bf16.mxu0 0
    %201 = vmatpush2.bf16.msra.mxu0 0
    %202 = vmatprep.subr.bf16.mxu0 0
    %203 = vmatpush2.bf16.msra.mxu0 0
    %204 = vmatprep.subr.bf16.mxu0 0
    %205 = vmatpush2.bf16.msra.mxu0 0
    %206 = vmatprep.mubr.bf16.mxu0 0
    %207 = vmatmul.mubr.bf16.gmra.mxu0 %v169
    %v208 = vpop.f32.mrf.mxu0
    %v209 = vadd.f32 0.0, %v208
    %v210 = vpop.f32.mrf.mxu0
    %v211 = vpop.f32.mrf.mxu0
    %v212 = vadd.f32 0.0, %v211
    %v213 = vpop.f32.mrf.mxu0
    %214 = vmatprep.mubr.bf16.mxu0 0
    %215 = vmatmul.mubr.bf16.gmra.mxu0 %v172
    %v216 = vpop.f32.mrf.mxu0
    %v217 = vadd.f32 0.0, %v216
    %v218 = vpop.f32.mrf.mxu0
    %v219 = vpop.f32.mrf.mxu0
    %v220 = vadd.f32 0.0, %v219
    %v221 = vpop.f32.mrf.mxu0
    %222 = vdwg.mxu0
    %v227 = vunpack.c.l.b16 %v77
    %v228 = vunpack.c.l.b16 %v78
    %v229 = vunpack.c.l.b16 %v79
    %v230 = vunpack.c.l.b16 %v80
    %v231 = vpack.c.b16 %v228, %v227
    %v232 = vpack.c.b16 %v230, %v229
    %234 = vrot.lane.b32.xlu0 %v156, 96
    %v235 = vpop.permute.xlu0 %234
    %v238 = vsel %vm167, %v231, 0
    %v241 = vsel %vm167, %v232, 0
    %243 = vmatprep.subr.bf16.mxu0 0
    %244 = vmatpush1.bf16.msra.mxu0 0
    %245 = vmatprep.subr.bf16.mxu0 0
    %246 = vmatpush1.bf16.msra.mxu0 0
    %247 = vmatprep.subr.bf16.mxu0 0
    %248 = vmatpush1.bf16.msra.mxu0 0
    %249 = vmatprep.subr.bf16.mxu0 0
    %250 = vmatpush1.bf16.msra.mxu0 0
    %251 = vmatprep.subr.bf16.mxu0 0
    %252 = vmatpush1.bf16.msra.mxu0 0
    %253 = vmatprep.subr.bf16.mxu0 0
    %254 = vmatpush1.bf16.msra.mxu0 0
    %255 = vmatprep.subr.bf16.mxu0 0
    %256 = vmatpush1.bf16.msra.mxu0 0
    %257 = vmatprep.subr.bf16.mxu0 0
    %258 = vmatpush1.bf16.msra.mxu0 %v235
    %259 = vmatprep.subr.bf16.mxu0 0
    %260 = vmatpush2.bf16.msra.mxu0 0
    %261 = vmatprep.subr.bf16.mxu0 0
    %262 = vmatpush2.bf16.msra.mxu0 0
    %263 = vmatprep.subr.bf16.mxu0 0
    %264 = vmatpush2.bf16.msra.mxu0 0
    %265 = vmatprep.subr.bf16.mxu0 0
    %266 = vmatpush2.bf16.msra.mxu0 0
    %267 = vmatprep.subr.bf16.mxu0 0
    %268 = vmatpush2.bf16.msra.mxu0 0
    %269 = vmatprep.subr.bf16.mxu0 0
    %270 = vmatpush2.bf16.msra.mxu0 0
    %271 = vmatprep.subr.bf16.mxu0 0
    %272 = vmatpush2.bf16.msra.mxu0 0
    %273 = vmatprep.subr.bf16.mxu0 0
    %274 = vmatpush2.bf16.msra.mxu0 0
    %275 = vmatprep.mubr.bf16.mxu0 0
    %276 = vmatmul.mubr.bf16.gmra.mxu0 %v238
    %v277 = vpop.f32.mrf.mxu0
    %v278 = vadd.f32 0.0, %v277
    %v279 = vpop.f32.mrf.mxu0
    %v280 = vpop.f32.mrf.mxu0
    %v281 = vadd.f32 0.0, %v280
    %v282 = vpop.f32.mrf.mxu0
    %283 = vmatprep.mubr.bf16.mxu0 0
    %284 = vmatmul.mubr.bf16.gmra.mxu0 %v241
    %v285 = vpop.f32.mrf.mxu0
    %v286 = vadd.f32 0.0, %v285
    %v287 = vpop.f32.mrf.mxu0
    %v288 = vpop.f32.mrf.mxu0
    %v289 = vadd.f32 0.0, %v288
    %v290 = vpop.f32.mrf.mxu0
    %291 = vdwg.mxu0
    %v296 = vunpack.c.l.b16 %v87
    %v297 = vunpack.c.l.b16 %v88
    %v298 = vunpack.c.l.b16 %v89
    %v299 = vunpack.c.l.b16 %v90
    %v300 = vpack.c.b16 %v297, %v296
    %v301 = vpack.c.b16 %v299, %v298
    %v303 = vsel %vm107, %v300, 0
    %v306 = vsel %vm107, %v301, 0
    %v309 = vsel %vm111, %v94, 0
    %311 = vmatprep.subr.bf16.mxu0 0
    %312 = vmatpush1.bf16.msra.mxu0 0
    %313 = vmatprep.subr.bf16.mxu0 0
    %314 = vmatpush1.bf16.msra.mxu0 0
    %315 = vmatprep.subr.bf16.mxu0 0
    %316 = vmatpush1.bf16.msra.mxu0 0
    %317 = vmatprep.subr.bf16.mxu0 0
    %318 = vmatpush1.bf16.msra.mxu0 0
    %319 = vmatprep.subr.bf16.mxu0 0
    %320 = vmatpush1.bf16.msra.mxu0 0
    %321 = vmatprep.subr.bf16.mxu0 0
    %322 = vmatpush1.bf16.msra.mxu0 0
    %323 = vmatprep.subr.bf16.mxu0 0
    %324 = vmatpush1.bf16.msra.mxu0 0
    %325 = vmatprep.subr.bf16.mxu0 0
    %326 = vmatpush1.bf16.msra.mxu0 %v309
    %327 = vmatprep.subr.bf16.mxu0 0
    %328 = vmatpush2.bf16.msra.mxu0 0
    %329 = vmatprep.subr.bf16.mxu0 0
    %330 = vmatpush2.bf16.msra.mxu0 0
    %331 = vmatprep.subr.bf16.mxu0 0
    %332 = vmatpush2.bf16.msra.mxu0 0
    %333 = vmatprep.subr.bf16.mxu0 0
    %334 = vmatpush2.bf16.msra.mxu0 0
    %335 = vmatprep.subr.bf16.mxu0 0
    %336 = vmatpush2.bf16.msra.mxu0 0
    %337 = vmatprep.subr.bf16.mxu0 0
    %338 = vmatpush2.bf16.msra.mxu0 0
    %339 = vmatprep.subr.bf16.mxu0 0
    %340 = vmatpush2.bf16.msra.mxu0 0
    %341 = vmatprep.subr.bf16.mxu0 0
    %342 = vmatpush2.bf16.msra.mxu0 0
    %343 = vmatprep.mubr.bf16.mxu0 0
    %344 = vmatmul.mubr.bf16.gmra.mxu0 %v303
    %v345 = vpop.f32.mrf.mxu0
    %v346 = vadd.f32 0.0, %v345
    %v347 = vpop.f32.mrf.mxu0
    %v348 = vpop.f32.mrf.mxu0
    %v349 = vadd.f32 0.0, %v348
    %v350 = vpop.f32.mrf.mxu0
    %351 = vmatprep.mubr.bf16.mxu0 0
    %352 = vmatmul.mubr.bf16.gmra.mxu0 %v306
    %v353 = vpop.f32.mrf.mxu0
    %v354 = vadd.f32 0.0, %v353
    %v355 = vpop.f32.mrf.mxu0
    %v356 = vpop.f32.mrf.mxu0
    %v357 = vadd.f32 0.0, %v356
    %v358 = vpop.f32.mrf.mxu0
    %359 = vdwg.mxu0
    %v360 = vadd.f32 %v278, %v346
    %v361 = vadd.f32 %v281, %v349
    %v362 = vadd.f32 %v286, %v354
    %v363 = vadd.f32 %v289, %v357
    %368 = vrot.lane.b32.xlu0 %v346, 32
    %v369 = vpop.permute.xlu0 %368
    %370 = vrot.lane.b32.xlu0 %v349, 32
    %v371 = vpop.permute.xlu0 %370
    %372 = vrot.lane.b32.xlu0 %v354, 32
    %v373 = vpop.permute.xlu0 %372
    %374 = vrot.lane.b32.xlu0 %v357, 32
    %v375 = vpop.permute.xlu0 %374
    %v380 = vadd.f32 %v278, %v369
    %v381 = vadd.f32 %v281, %v371
    %v382 = vadd.f32 %v286, %v373
    %v383 = vadd.f32 %v289, %v375
    %v384 = vmul.f32 %v209, %v360
    %v385 = vmul.f32 %v212, %v361
    %v386 = vmul.f32 %v217, %v362
    %v387 = vmul.f32 %v220, %v363
    %vm388 = vcmask 261120
    %v389 = vsel %vm388, %v384, 0.0
    %390 = vadd.xlane.f32.xlu0 %v389
    %v391 = vpop.xlane.xlu0 %390
    %v392 = vsel %vm388, %v385, 0.0
    %393 = vadd.xlane.f32.xlu0 %v392
    %v394 = vpop.xlane.xlu0 %393
    %v395 = vsel %vm388, %v386, 0.0
    %396 = vadd.xlane.f32.xlu0 %v395
    %v397 = vpop.xlane.xlu0 %396
    %v398 = vsel %vm388, %v387, 0.0
    %399 = vadd.xlane.f32.xlu0 %v398
    %v400 = vpop.xlane.xlu0 %399
    %v401 = vmul.f32 %v391, 0.17677669
    %v402 = vmul.f32 %v394, 0.17677669
    %v403 = vmul.f32 %v397, 0.17677669
    %v404 = vmul.f32 %v400, 0.17677669
    %v405 = vmax.f32 %v401, %v402
    %v406 = vmax.f32 %v403, %v404
    %v407 = vmax.f32 %v405, %v406
    %v408 = vrot.slane %v407, 4
    %v409 = vmax.f32 %v407, %v408
    %v410 = vrot.slane %v409, 2
    %v411 = vmax.f32 %v409, %v410
    %v412 = vrot.slane %v411, 1
    %v413 = vmax.f32 %v411, %v412
    %s414 = vtos %v413
    %v415 = vstv %s414
    %v416 = vsub.f32 %v401, %v415
    %v417 = vsub.f32 %v402, %v415
    %v418 = vsub.f32 %v403, %v415
    %v419 = vsub.f32 %v404, %v415
    %v420 = vmul.f32 %v416, 1.442695
    %v421 = vpow.pop %v420
    %v422 = vmul.f32 %v417, 1.442695
    %v423 = vpow.pop %v422
    %v424 = vmul.f32 %v418, 1.442695
    %v425 = vpow.pop %v424
    %v426 = vmul.f32 %v419, 1.442695
    %v427 = vpow.pop %v426
    %v428 = vmul.f32 %v421, %v380
    %v429 = vmul.f32 %v423, %v381
    %v430 = vmul.f32 %v425, %v382
    %v431 = vmul.f32 %v427, %v383
    %436 = vrot.lane.b32.xlu0 %v428, 96
    %v437 = vpop.permute.xlu0 %436
    %438 = vrot.lane.b32.xlu0 %v429, 96
    %v439 = vpop.permute.xlu0 %438
    %440 = vrot.lane.b32.xlu0 %v430, 96
    %v441 = vpop.permute.xlu0 %440
    %442 = vrot.lane.b32.xlu0 %v431, 96
    %v443 = vpop.permute.xlu0 %442
    %v448 = vsel %vm388, %v437, %v421
    %v449 = vsel %vm388, %v439, %v423
    %v450 = vsel %vm388, %v441, %v425
    %v451 = vsel %vm388, %v443, %v427
    %v452 = vpack.c.bf16 %v449, %v448
    %v453 = vpack.c.bf16 %v451, %v450
    %v456 = vunpack.c.l.b16 %v85
    %v457 = vunpack.c.l.b16 %v86
    %v458 = vpack.c.b16 %v457, %v456
    %v460 = vsel %vm388, %v458, 0
    %462 = vmatprep.subr.bf16.mxu0 0
    %463 = vmatpush1.bf16.msra.mxu0 0
    %464 = vmatprep.subr.bf16.mxu0 0
    %465 = vmatpush1.bf16.msra.mxu0 0
    %466 = vmatprep.subr.bf16.mxu0 0
    %467 = vmatpush1.bf16.msra.mxu0 0
    %468 = vmatprep.subr.bf16.mxu0 0
    %469 = vmatpush1.bf16.msra.mxu0 0
    %470 = vmatprep.subr.bf16.mxu0 0
    %471 = vmatpush1.bf16.msra.mxu0 0
    %472 = vmatprep.subr.bf16.mxu0 0
    %473 = vmatpush1.bf16.msra.mxu0 0
    %474 = vmatprep.subr.bf16.mxu0 0
    %475 = vmatpush1.bf16.msra.mxu0 %v453
    %476 = vmatprep.subr.bf16.mxu0 0
    %477 = vmatpush1.bf16.msra.mxu0 %v452
    %478 = vmatprep.subr.bf16.mxu0 0
    %479 = vmatpush2.bf16.msra.mxu0 0
    %480 = vmatprep.subr.bf16.mxu0 0
    %481 = vmatpush2.bf16.msra.mxu0 0
    %482 = vmatprep.subr.bf16.mxu0 0
    %483 = vmatpush2.bf16.msra.mxu0 0
    %484 = vmatprep.subr.bf16.mxu0 0
    %485 = vmatpush2.bf16.msra.mxu0 0
    %486 = vmatprep.subr.bf16.mxu0 0
    %487 = vmatpush2.bf16.msra.mxu0 0
    %488 = vmatprep.subr.bf16.mxu0 0
    %489 = vmatpush2.bf16.msra.mxu0 0
    %490 = vmatprep.subr.bf16.mxu0 0
    %491 = vmatpush2.bf16.msra.mxu0 0
    %492 = vmatprep.subr.bf16.mxu0 0
    %493 = vmatpush2.bf16.msra.mxu0 0
    %494 = vmatprep.mubr.bf16.mxu0 0
    %495 = vmatmul.mubr.bf16.gmra.mxu0 %v460
    %v496 = vpop.f32.mrf.mxu0
    %v497 = vadd.f32 0.0, %v496
    %v498 = vpop.f32.mrf.mxu0
    %v499 = vpop.f32.mrf.mxu0
    %v500 = vadd.f32 0.0, %v499
    %v501 = vpop.f32.mrf.mxu0
    %502 = vdwg.mxu0
    %vm503 = vcmp.gt.f32.partialorder %v497, 0.0
    %vm504 = vcmp.gt.f32.partialorder %v500, 0.0
    %v505 = vsel %vm503, %v497, 1.0
    %v506 = vsel %vm504, %v500, 1.0
    %v507 = vrcp.pop %v505
    %v508 = vrcp.pop %v506
    %510 = vset.pattern.permute.xlu0 32
    %511 = vperm.xlu0 %510, %v507
    %v512 = vpop.permute.xlu0 %511
    %515 = vset.pattern.permute.xlu0 32
    %516 = vperm.xlu0 %515, %v508
    %v517 = vpop.permute.xlu0 %516
    %v519 = vmul.f32 %v497, %v512
    %v520 = vmul.f32 %v500, %v517
    %v521 = vlaneseq
    %v522 = vshrl.u32 %v521, 7
    %v523 = vsub.s32 3, %v522
    %v524 = vrot.slane %v99, %v523
    %v525 = vmul.f32 %v519, %v524
    %v526 = vmul.f32 %v520, %v524
    %v527 = vlaneseq
    %v528 = vshrl.u32 %v527, 7
    %v529 = vsub.s32 4, %v528
    %v530 = vrot.slane %v99, %v529
    %532 = vrot.lane.b32.xlu0 %v530, 96
    %v533 = vpop.permute.xlu0 %532
    %v535 = vmul.f32 %v150, %v533
    %v536 = vmul.f32 %v153, %v533
    %539 = vrot.lane.b32.xlu0 %v535, 32
    %v540 = vpop.permute.xlu0 %539
    %541 = vrot.lane.b32.xlu0 %v536, 32
    %v542 = vpop.permute.xlu0 %541
    %v545 = vadd.f32 %v525, %v540
    %v546 = vadd.f32 %v526, %v542
    %v547 = vsel %vm388, %v545, 0.0
    %548 = vadd.xlane.f32.xlu0 %v547
    %v549 = vpop.xlane.xlu0 %548
    %v550 = vsel %vm388, %v546, 0.0
    %551 = vadd.xlane.f32.xlu0 %v550
    %v552 = vpop.xlane.xlu0 %551
    %v553 = vxor.u32 %v549, 2147483648
    %v554 = vxor.u32 %v552, 2147483648
    %v555 = vmul.f32 %v553, 1.442695
    %v556 = vpow.pop %v555
    %v557 = vmul.f32 %v554, 1.442695
    %v558 = vpow.pop %v557
    %v559 = vadd.f32 %v556, 1.0
    %v560 = vadd.f32 %v558, 1.0
    %v561 = vrcp.pop %v559
    %v562 = vmul.f32 1.0, %v561
    %v563 = vrcp.pop %v560
    %v564 = vmul.f32 1.0, %v563
    %v565 = vmul.f32 %v562, %v150
    %v566 = vmul.f32 %v564, %v153
    %v567 = vsub.f32 1.0, %v562
    %v568 = vsub.f32 1.0, %v564
    %v569 = vmul.f32 %v567, %v519
    %v570 = vmul.f32 %v568, %v520
    %573 = vrot.lane.b32.xlu0 %v569, 96
    %v574 = vpop.permute.xlu0 %573
    %575 = vrot.lane.b32.xlu0 %v570, 96
    %v576 = vpop.permute.xlu0 %575
    %v579 = vadd.f32 %v565, %v574
    %v580 = vadd.f32 %v566, %v576
    %v581 = vpack.c.bf16 %v580, %v579
    %v582 = vlaneseq
    %v583 = vshrl.u32 %v582, 7
    %v584 = vsub.s32 0, %v583
    %v585 = vrot.slane %v99, %v584
    %587 = vrot.lane.b32.xlu0 %v581, 32
    %v588 = vpop.permute.xlu0 %587
    %v593 = vunpack.c.l.b16 %v95
    %v594 = vunpack.c.l.b16 %v96
    %v595 = vunpack.c.l.b16 %v97
    %v596 = vunpack.c.l.b16 %v98
    %v597 = vpack.c.b16 %v594, %v593
    %v598 = vpack.c.b16 %v596, %v595
    %v602 = vsel %vm388, %v588, 0
    %604 = vmatprep.subr.bf16.mxu0 0
    %605 = vmatpush1.bf16.msra.mxu0 0
    %606 = vmatprep.subr.bf16.mxu0 0
    %607 = vmatpush1.bf16.msra.mxu0 0
    %608 = vmatprep.subr.bf16.mxu0 0
    %609 = vmatpush1.bf16.msra.mxu0 0
    %610 = vmatprep.subr.bf16.mxu0 0
    %611 = vmatpush1.bf16.msra.mxu0 0
    %612 = vmatprep.subr.bf16.mxu0 0
    %613 = vmatpush1.bf16.msra.mxu0 0
    %614 = vmatprep.subr.bf16.mxu0 0
    %615 = vmatpush1.bf16.msra.mxu0 0
    %616 = vmatprep.subr.bf16.mxu0 0
    %617 = vmatpush1.bf16.msra.mxu0 %v598
    %618 = vmatprep.subr.bf16.mxu0 0
    %619 = vmatpush1.bf16.msra.mxu0 %v597
    %620 = vmatprep.subr.bf16.mxu0 0
    %621 = vmatpush2.bf16.msra.mxu0 0
    %622 = vmatprep.subr.bf16.mxu0 0
    %623 = vmatpush2.bf16.msra.mxu0 0
    %624 = vmatprep.subr.bf16.mxu0 0
    %625 = vmatpush2.bf16.msra.mxu0 0
    %626 = vmatprep.subr.bf16.mxu0 0
    %627 = vmatpush2.bf16.msra.mxu0 0
    %628 = vmatprep.subr.bf16.mxu0 0
    %629 = vmatpush2.bf16.msra.mxu0 0
    %630 = vmatprep.subr.bf16.mxu0 0
    %631 = vmatpush2.bf16.msra.mxu0 0
    %632 = vmatprep.subr.bf16.mxu0 0
    %633 = vmatpush2.bf16.msra.mxu0 0
    %634 = vmatprep.subr.bf16.mxu0 0
    %635 = vmatpush2.bf16.msra.mxu0 0
    %636 = vmatprep.mubr.bf16.mxu0 0
    %637 = vmatmul.mubr.bf16.gmra.mxu0 %v602
    %v638 = vpop.f32.mrf.mxu0
    %v639 = vadd.f32 %v585, %v638
    %v640 = vpop.f32.mrf.mxu0
    %v641 = vpop.f32.mrf.mxu0
    %v642 = vadd.f32 %v585, %v641
    %v643 = vpop.f32.mrf.mxu0
    %644 = vdwg.mxu0
    %v645 = vmax.f32 %v639, 0.0
    %v646 = vmax.f32 %v642, 0.0
    %v647 = vlaneseq
    %v648 = vshrl.u32 %v647, 7
    %v649 = vsub.s32 1, %v648
    %v650 = vrot.slane %v99, %v649
    %v651 = vmul.f32 %v645, %v650
    %v652 = vmul.f32 %v646, %v650
    %v653 = vlaneseq
    %v654 = vshrl.u32 %v653, 7
    %v655 = vsub.s32 2, %v654
    %v656 = vrot.slane %v99, %v655
    %v657 = vadd.f32 %v651, %v656
    %v658 = vadd.f32 %v652, %v656
    %v659 = vadd.f32 %v657, 0.0
    %v660 = vadd.f32 %v658, 0.0
    %v661 = vld [vmem:[%s11] sm:$0xf]
    %v662 = vld [vmem:[%s11 + $0x4] sm:$0xf]
    %v663 = vld [vmem:[%s11 + $0x8] sm:$0xf]
    %v664 = vld [vmem:[%s11 + $0xc] sm:$0xf]
    %v665 = vld [vmem:[%s12] sm:$0x1]
    %v666 = vld [vmem:[%s13] sm:$0xf]
    %v667 = vld [vmem:[%s14] sm:$0xf]
    %v668 = vld [vmem:[%s14 + $0x4] sm:$0xf]
    %v669 = vld [vmem:[%s14 + $0x8] sm:$0xf]
    %v670 = vld [vmem:[%s14 + $0xc] sm:$0xf]
    %v671 = vld [vmem:[%s15] sm:$0x1f]
    %v672 = vpack.c.bf16 %v658, %v657
    %v674 = vlaneseq
    %v675 = vshrl.u32 %v674, 7
    %v676 = vsub.s32 0, %v675
    %v677 = vrot.slane %v665, %v676
    %v683 = vunpack.c.l.b16 %v661
    %v684 = vunpack.c.l.b16 %v662
    %v685 = vunpack.c.l.b16 %v663
    %v686 = vunpack.c.l.b16 %v664
    %v687 = vpack.c.b16 %v684, %v683
    %v688 = vpack.c.b16 %v686, %v685
    %v692 = vsel %vm388, %v672, 0
    %694 = vmatprep.subr.bf16.mxu0 0
    %695 = vmatpush1.bf16.msra.mxu0 0
    %696 = vmatprep.subr.bf16.mxu0 0
    %697 = vmatpush1.bf16.msra.mxu0 0
    %698 = vmatprep.subr.bf16.mxu0 0
    %699 = vmatpush1.bf16.msra.mxu0 0
    %700 = vmatprep.subr.bf16.mxu0 0
    %701 = vmatpush1.bf16.msra.mxu0 0
    %702 = vmatprep.subr.bf16.mxu0 0
    %703 = vmatpush1.bf16.msra.mxu0 0
    %704 = vmatprep.subr.bf16.mxu0 0
    %705 = vmatpush1.bf16.msra.mxu0 0
    %706 = vmatprep.subr.bf16.mxu0 0
    %707 = vmatpush1.bf16.msra.mxu0 %v688
    %708 = vmatprep.subr.bf16.mxu0 0
    %709 = vmatpush1.bf16.msra.mxu0 %v687
    %710 = vmatprep.subr.bf16.mxu0 0
    %711 = vmatpush2.bf16.msra.mxu0 0
    %712 = vmatprep.subr.bf16.mxu0 0
    %713 = vmatpush2.bf16.msra.mxu0 0
    %714 = vmatprep.subr.bf16.mxu0 0
    %715 = vmatpush2.bf16.msra.mxu0 0
    %716 = vmatprep.subr.bf16.mxu0 0
    %717 = vmatpush2.bf16.msra.mxu0 0
    %718 = vmatprep.subr.bf16.mxu0 0
    %719 = vmatpush2.bf16.msra.mxu0 0
    %720 = vmatprep.subr.bf16.mxu0 0
    %721 = vmatpush2.bf16.msra.mxu0 0
    %722 = vmatprep.subr.bf16.mxu0 0
    %723 = vmatpush2.bf16.msra.mxu0 0
    %724 = vmatprep.subr.bf16.mxu0 0
    %725 = vmatpush2.bf16.msra.mxu0 0
    %726 = vmatprep.mubr.bf16.mxu0 0
    %727 = vmatmul.mubr.bf16.gmra.mxu0 %v692
    %v728 = vpop.f32.mrf.mxu0
    %v729 = vadd.f32 %v677, %v728
    %v730 = vpop.f32.mrf.mxu0
    %v731 = vpop.f32.mrf.mxu0
    %v732 = vadd.f32 %v677, %v731
    %v733 = vpop.f32.mrf.mxu0
    %734 = vdwg.mxu0
    %v735 = vpack.c.bf16 %v732, %v729
    %736 = vmatprep.subr.bf16.mxu0 0
    %737 = vmatpush1.bf16.msra.mxu0 0
    %738 = vmatprep.subr.bf16.mxu0 0
    %739 = vmatpush1.bf16.msra.mxu0 0
    %740 = vmatprep.subr.bf16.mxu0 0
    %741 = vmatpush1.bf16.msra.mxu0 0
    %742 = vmatprep.subr.bf16.mxu0 0
    %743 = vmatpush1.bf16.msra.mxu0 0
    %744 = vmatprep.subr.bf16.mxu0 0
    %745 = vmatpush1.bf16.msra.mxu0 0
    %746 = vmatprep.subr.bf16.mxu0 0
    %747 = vmatpush1.bf16.msra.mxu0 0
    %748 = vmatprep.subr.bf16.mxu0 0
    %749 = vmatpush1.bf16.msra.mxu0 0
    %750 = vmatprep.subr.bf16.mxu0 0
    %751 = vmatpush1.bf16.msra.mxu0 %v735
    %752 = vmatprep.subr.bf16.mxu0 0
    %753 = vmatpush2.bf16.msra.mxu0 0
    %754 = vmatprep.subr.bf16.mxu0 0
    %755 = vmatpush2.bf16.msra.mxu0 0
    %756 = vmatprep.subr.bf16.mxu0 0
    %757 = vmatpush2.bf16.msra.mxu0 0
    %758 = vmatprep.subr.bf16.mxu0 0
    %759 = vmatpush2.bf16.msra.mxu0 0
    %760 = vmatprep.subr.bf16.mxu0 0
    %761 = vmatpush2.bf16.msra.mxu0 0
    %762 = vmatprep.subr.bf16.mxu0 0
    %763 = vmatpush2.bf16.msra.mxu0 0
    %764 = vmatprep.subr.bf16.mxu0 0
    %765 = vmatpush2.bf16.msra.mxu0 0
    %766 = vmatprep.subr.bf16.mxu0 0
    %767 = vmatpush2.bf16.msra.mxu0 0
    %768 = vmatprep.mubr.bf16.mxu0 0
    %769 = vmatmul.mubr.bf16.gmra.mxu0 %v169
    %v770 = vpop.f32.mrf.mxu0
    %v771 = vadd.f32 0.0, %v770
    %v772 = vpop.f32.mrf.mxu0
    %v773 = vpop.f32.mrf.mxu0
    %v774 = vadd.f32 0.0, %v773
    %v775 = vpop.f32.mrf.mxu0
    %776 = vmatprep.mubr.bf16.mxu0 0
    %777 = vmatmul.mubr.bf16.gmra.mxu0 %v172
    %v778 = vpop.f32.mrf.mxu0
    %v779 = vadd.f32 0.0, %v778
    %v780 = vpop.f32.mrf.mxu0
    %v781 = vpop.f32.mrf.mxu0
    %v782 = vadd.f32 0.0, %v781
    %v783 = vpop.f32.mrf.mxu0
    %784 = vdwg.mxu0
    %786 = vrot.lane.b32.xlu0 %v735, 96
    %v787 = vpop.permute.xlu0 %786
    %789 = vmatprep.subr.bf16.mxu0 0
    %790 = vmatpush1.bf16.msra.mxu0 0
    %791 = vmatprep.subr.bf16.mxu0 0
    %792 = vmatpush1.bf16.msra.mxu0 0
    %793 = vmatprep.subr.bf16.mxu0 0
    %794 = vmatpush1.bf16.msra.mxu0 0
    %795 = vmatprep.subr.bf16.mxu0 0
    %796 = vmatpush1.bf16.msra.mxu0 0
    %797 = vmatprep.subr.bf16.mxu0 0
    %798 = vmatpush1.bf16.msra.mxu0 0
    %799 = vmatprep.subr.bf16.mxu0 0
    %800 = vmatpush1.bf16.msra.mxu0 0
    %801 = vmatprep.subr.bf16.mxu0 0
    %802 = vmatpush1.bf16.msra.mxu0 0
    %803 = vmatprep.subr.bf16.mxu0 0
    %804 = vmatpush1.bf16.msra.mxu0 %v787
    %805 = vmatprep.subr.bf16.mxu0 0
    %806 = vmatpush2.bf16.msra.mxu0 0
    %807 = vmatprep.subr.bf16.mxu0 0
    %808 = vmatpush2.bf16.msra.mxu0 0
    %809 = vmatprep.subr.bf16.mxu0 0
    %810 = vmatpush2.bf16.msra.mxu0 0
    %811 = vmatprep.subr.bf16.mxu0 0
    %812 = vmatpush2.bf16.msra.mxu0 0
    %813 = vmatprep.subr.bf16.mxu0 0
    %814 = vmatpush2.bf16.msra.mxu0 0
    %815 = vmatprep.subr.bf16.mxu0 0
    %816 = vmatpush2.bf16.msra.mxu0 0
    %817 = vmatprep.subr.bf16.mxu0 0
    %818 = vmatpush2.bf16.msra.mxu0 0
    %819 = vmatprep.subr.bf16.mxu0 0
    %820 = vmatpush2.bf16.msra.mxu0 0
    %821 = vmatprep.mubr.bf16.mxu0 0
    %822 = vmatmul.mubr.bf16.gmra.mxu0 %v238
    %v823 = vpop.f32.mrf.mxu0
    %v824 = vadd.f32 0.0, %v823
    %v825 = vpop.f32.mrf.mxu0
    %v826 = vpop.f32.mrf.mxu0
    %v827 = vadd.f32 0.0, %v826
    %v828 = vpop.f32.mrf.mxu0
    %829 = vmatprep.mubr.bf16.mxu0 0
    %830 = vmatmul.mubr.bf16.gmra.mxu0 %v241
    %v831 = vpop.f32.mrf.mxu0
    %v832 = vadd.f32 0.0, %v831
    %v833 = vpop.f32.mrf.mxu0
    %v834 = vpop.f32.mrf.mxu0
    %v835 = vadd.f32 0.0, %v834
    %v836 = vpop.f32.mrf.mxu0
    %837 = vdwg.mxu0
    %v839 = vsel %vm111, %v666, 0
    %841 = vmatprep.subr.bf16.mxu0 0
    %842 = vmatpush1.bf16.msra.mxu0 0
    %843 = vmatprep.subr.bf16.mxu0 0
    %844 = vmatpush1.bf16.msra.mxu0 0
    %845 = vmatprep.subr.bf16.mxu0 0
    %846 = vmatpush1.bf16.msra.mxu0 0
    %847 = vmatprep.subr.bf16.mxu0 0
    %848 = vmatpush1.bf16.msra.mxu0 0
    %849 = vmatprep.subr.bf16.mxu0 0
    %850 = vmatpush1.bf16.msra.mxu0 0
    %851 = vmatprep.subr.bf16.mxu0 0
    %852 = vmatpush1.bf16.msra.mxu0 0
    %853 = vmatprep.subr.bf16.mxu0 0
    %854 = vmatpush1.bf16.msra.mxu0 0
    %855 = vmatprep.subr.bf16.mxu0 0
    %856 = vmatpush1.bf16.msra.mxu0 %v839
    %857 = vmatprep.subr.bf16.mxu0 0
    %858 = vmatpush2.bf16.msra.mxu0 0
    %859 = vmatprep.subr.bf16.mxu0 0
    %860 = vmatpush2.bf16.msra.mxu0 0
    %861 = vmatprep.subr.bf16.mxu0 0
    %862 = vmatpush2.bf16.msra.mxu0 0
    %863 = vmatprep.subr.bf16.mxu0 0
    %864 = vmatpush2.bf16.msra.mxu0 0
    %865 = vmatprep.subr.bf16.mxu0 0
    %866 = vmatpush2.bf16.msra.mxu0 0
    %867 = vmatprep.subr.bf16.mxu0 0
    %868 = vmatpush2.bf16.msra.mxu0 0
    %869 = vmatprep.subr.bf16.mxu0 0
    %870 = vmatpush2.bf16.msra.mxu0 0
    %871 = vmatprep.subr.bf16.mxu0 0
    %872 = vmatpush2.bf16.msra.mxu0 0
    %873 = vmatprep.mubr.bf16.mxu0 0
    %874 = vmatmul.mubr.bf16.gmra.mxu0 %v303
    %v875 = vpop.f32.mrf.mxu0
    %v876 = vadd.f32 0.0, %v875
    %v877 = vpop.f32.mrf.mxu0
    %v878 = vpop.f32.mrf.mxu0
    %v879 = vadd.f32 0.0, %v878
    %v880 = vpop.f32.mrf.mxu0
    %881 = vmatprep.mubr.bf16.mxu0 0
    %882 = vmatmul.mubr.bf16.gmra.mxu0 %v306
    %v883 = vpop.f32.mrf.mxu0
    %v884 = vadd.f32 0.0, %v883
    %v885 = vpop.f32.mrf.mxu0
    %v886 = vpop.f32.mrf.mxu0
    %v887 = vadd.f32 0.0, %v886
    %v888 = vpop.f32.mrf.mxu0
    %889 = vdwg.mxu0
    %v890 = vadd.f32 %v824, %v876
    %v891 = vadd.f32 %v827, %v879
    %v892 = vadd.f32 %v832, %v884
    %v893 = vadd.f32 %v835, %v887
    %898 = vrot.lane.b32.xlu0 %v876, 32
    %v899 = vpop.permute.xlu0 %898
    %900 = vrot.lane.b32.xlu0 %v879, 32
    %v901 = vpop.permute.xlu0 %900
    %902 = vrot.lane.b32.xlu0 %v884, 32
    %v903 = vpop.permute.xlu0 %902
    %904 = vrot.lane.b32.xlu0 %v887, 32
    %v905 = vpop.permute.xlu0 %904
    %v910 = vadd.f32 %v824, %v899
    %v911 = vadd.f32 %v827, %v901
    %v912 = vadd.f32 %v832, %v903
    %v913 = vadd.f32 %v835, %v905
    %v914 = vmul.f32 %v771, %v890
    %v915 = vmul.f32 %v774, %v891
    %v916 = vmul.f32 %v779, %v892
    %v917 = vmul.f32 %v782, %v893
    %v918 = vsel %vm388, %v914, 0.0
    %919 = vadd.xlane.f32.xlu0 %v918
    %v920 = vpop.xlane.xlu0 %919
    %v921 = vsel %vm388, %v915, 0.0
    %922 = vadd.xlane.f32.xlu0 %v921
    %v923 = vpop.xlane.xlu0 %922
    %v924 = vsel %vm388, %v916, 0.0
    %925 = vadd.xlane.f32.xlu0 %v924
    %v926 = vpop.xlane.xlu0 %925
    %v927 = vsel %vm388, %v917, 0.0
    %928 = vadd.xlane.f32.xlu0 %v927
    %v929 = vpop.xlane.xlu0 %928
    %v930 = vmul.f32 %v920, 0.17677669
    %v931 = vmul.f32 %v923, 0.17677669
    %v932 = vmul.f32 %v926, 0.17677669
    %v933 = vmul.f32 %v929, 0.17677669
    %v934 = vmax.f32 %v930, %v931
    %v935 = vmax.f32 %v932, %v933
    %v936 = vmax.f32 %v934, %v935
    %v937 = vrot.slane %v936, 4
    %v938 = vmax.f32 %v936, %v937
    %v939 = vrot.slane %v938, 2
    %v940 = vmax.f32 %v938, %v939
    %v941 = vrot.slane %v940, 1
    %v942 = vmax.f32 %v940, %v941
    %s943 = vtos %v942
    %v944 = vstv %s943
    %v945 = vsub.f32 %v930, %v944
    %v946 = vsub.f32 %v931, %v944
    %v947 = vsub.f32 %v932, %v944
    %v948 = vsub.f32 %v933, %v944
    %v949 = vmul.f32 %v945, 1.442695
    %v950 = vpow.pop %v949
    %v951 = vmul.f32 %v946, 1.442695
    %v952 = vpow.pop %v951
    %v953 = vmul.f32 %v947, 1.442695
    %v954 = vpow.pop %v953
    %v955 = vmul.f32 %v948, 1.442695
    %v956 = vpow.pop %v955
    %v957 = vmul.f32 %v950, %v910
    %v958 = vmul.f32 %v952, %v911
    %v959 = vmul.f32 %v954, %v912
    %v960 = vmul.f32 %v956, %v913
    %965 = vrot.lane.b32.xlu0 %v957, 96
    %v966 = vpop.permute.xlu0 %965
    %967 = vrot.lane.b32.xlu0 %v958, 96
    %v968 = vpop.permute.xlu0 %967
    %969 = vrot.lane.b32.xlu0 %v959, 96
    %v970 = vpop.permute.xlu0 %969
    %971 = vrot.lane.b32.xlu0 %v960, 96
    %v972 = vpop.permute.xlu0 %971
    %v977 = vsel %vm388, %v966, %v950
    %v978 = vsel %vm388, %v968, %v952
    %v979 = vsel %vm388, %v970, %v954
    %v980 = vsel %vm388, %v972, %v956
    %v981 = vpack.c.bf16 %v978, %v977
    %v982 = vpack.c.bf16 %v980, %v979
    %983 = vmatprep.subr.bf16.mxu0 0
    %984 = vmatpush1.bf16.msra.mxu0 0
    %985 = vmatprep.subr.bf16.mxu0 0
    %986 = vmatpush1.bf16.msra.mxu0 0
    %987 = vmatprep.subr.bf16.mxu0 0
    %988 = vmatpush1.bf16.msra.mxu0 0
    %989 = vmatprep.subr.bf16.mxu0 0
    %990 = vmatpush1.bf16.msra.mxu0 0
    %991 = vmatprep.subr.bf16.mxu0 0
    %992 = vmatpush1.bf16.msra.mxu0 0
    %993 = vmatprep.subr.bf16.mxu0 0
    %994 = vmatpush1.bf16.msra.mxu0 0
    %995 = vmatprep.subr.bf16.mxu0 0
    %996 = vmatpush1.bf16.msra.mxu0 %v982
    %997 = vmatprep.subr.bf16.mxu0 0
    %998 = vmatpush1.bf16.msra.mxu0 %v981
    %999 = vmatprep.subr.bf16.mxu0 0
    %1000 = vmatpush2.bf16.msra.mxu0 0
    %1001 = vmatprep.subr.bf16.mxu0 0
    %1002 = vmatpush2.bf16.msra.mxu0 0
    %1003 = vmatprep.subr.bf16.mxu0 0
    %1004 = vmatpush2.bf16.msra.mxu0 0
    %1005 = vmatprep.subr.bf16.mxu0 0
    %1006 = vmatpush2.bf16.msra.mxu0 0
    %1007 = vmatprep.subr.bf16.mxu0 0
    %1008 = vmatpush2.bf16.msra.mxu0 0
    %1009 = vmatprep.subr.bf16.mxu0 0
    %1010 = vmatpush2.bf16.msra.mxu0 0
    %1011 = vmatprep.subr.bf16.mxu0 0
    %1012 = vmatpush2.bf16.msra.mxu0 0
    %1013 = vmatprep.subr.bf16.mxu0 0
    %1014 = vmatpush2.bf16.msra.mxu0 0
    %1015 = vmatprep.mubr.bf16.mxu0 0
    %1016 = vmatmul.mubr.bf16.gmra.mxu0 %v460
    %v1017 = vpop.f32.mrf.mxu0
    %v1018 = vadd.f32 0.0, %v1017
    %v1019 = vpop.f32.mrf.mxu0
    %v1020 = vpop.f32.mrf.mxu0
    %v1021 = vadd.f32 0.0, %v1020
    %v1022 = vpop.f32.mrf.mxu0
    %1023 = vdwg.mxu0
    %vm1024 = vcmp.gt.f32.partialorder %v1018, 0.0
    %vm1025 = vcmp.gt.f32.partialorder %v1021, 0.0
    %v1026 = vsel %vm1024, %v1018, 1.0
    %v1027 = vsel %vm1025, %v1021, 1.0
    %v1028 = vrcp.pop %v1026
    %v1029 = vrcp.pop %v1027
    %1031 = vset.pattern.permute.xlu0 32
    %1032 = vperm.xlu0 %1031, %v1028
    %v1033 = vpop.permute.xlu0 %1032
    %1036 = vset.pattern.permute.xlu0 32
    %1037 = vperm.xlu0 %1036, %v1029
    %v1038 = vpop.permute.xlu0 %1037
    %v1040 = vmul.f32 %v1018, %v1033
    %v1041 = vmul.f32 %v1021, %v1038
    %v1042 = vlaneseq
    %v1043 = vshrl.u32 %v1042, 7
    %v1044 = vsub.s32 3, %v1043
    %v1045 = vrot.slane %v671, %v1044
    %v1046 = vmul.f32 %v1040, %v1045
    %v1047 = vmul.f32 %v1041, %v1045
    %v1048 = vlaneseq
    %v1049 = vshrl.u32 %v1048, 7
    %v1050 = vsub.s32 4, %v1049
    %v1051 = vrot.slane %v671, %v1050
    %1053 = vrot.lane.b32.xlu0 %v1051, 96
    %v1054 = vpop.permute.xlu0 %1053
    %v1056 = vmul.f32 %v729, %v1054
    %v1057 = vmul.f32 %v732, %v1054
    %1060 = vrot.lane.b32.xlu0 %v1056, 32
    %v1061 = vpop.permute.xlu0 %1060
    %1062 = vrot.lane.b32.xlu0 %v1057, 32
    %v1063 = vpop.permute.xlu0 %1062
    %v1066 = vadd.f32 %v1046, %v1061
    %v1067 = vadd.f32 %v1047, %v1063
    %v1068 = vsel %vm388, %v1066, 0.0
    %1069 = vadd.xlane.f32.xlu0 %v1068
    %v1070 = vpop.xlane.xlu0 %1069
    %v1071 = vsel %vm388, %v1067, 0.0
    %1072 = vadd.xlane.f32.xlu0 %v1071
    %v1073 = vpop.xlane.xlu0 %1072
    %v1074 = vxor.u32 %v1070, 2147483648
    %v1075 = vxor.u32 %v1073, 2147483648
    %v1076 = vmul.f32 %v1074, 1.442695
    %v1077 = vpow.pop %v1076
    %v1078 = vmul.f32 %v1075, 1.442695
    %v1079 = vpow.pop %v1078
    %v1080 = vadd.f32 %v1077, 1.0
    %v1081 = vadd.f32 %v1079, 1.0
    %v1082 = vrcp.pop %v1080
    %v1083 = vmul.f32 1.0, %v1082
    %v1084 = vrcp.pop %v1081
    %v1085 = vmul.f32 1.0, %v1084
    %v1086 = vmul.f32 %v1083, %v729
    %v1087 = vmul.f32 %v1085, %v732
    %v1088 = vsub.f32 1.0, %v1083
    %v1089 = vsub.f32 1.0, %v1085
    %v1090 = vmul.f32 %v1088, %v1040
    %v1091 = vmul.f32 %v1089, %v1041
    %1094 = vrot.lane.b32.xlu0 %v1090, 96
    %v1095 = vpop.permute.xlu0 %1094
    %1096 = vrot.lane.b32.xlu0 %v1091, 96
    %v1097 = vpop.permute.xlu0 %1096
    %v1100 = vadd.f32 %v1086, %v1095
    %v1101 = vadd.f32 %v1087, %v1097
    %v1102 = vpack.c.bf16 %v1101, %v1100
    %v1103 = vlaneseq
    %v1104 = vshrl.u32 %v1103, 7
    %v1105 = vsub.s32 0, %v1104
    %v1106 = vrot.slane %v671, %v1105
    %1108 = vrot.lane.b32.xlu0 %v1102, 32
    %v1109 = vpop.permute.xlu0 %1108
    %v1114 = vunpack.c.l.b16 %v667
    %v1115 = vunpack.c.l.b16 %v668
    %v1116 = vunpack.c.l.b16 %v669
    %v1117 = vunpack.c.l.b16 %v670
    %v1118 = vpack.c.b16 %v1115, %v1114
    %v1119 = vpack.c.b16 %v1117, %v1116
    %v1123 = vsel %vm388, %v1109, 0
    %1125 = vmatprep.subr.bf16.mxu0 0
    %1126 = vmatpush1.bf16.msra.mxu0 0
    %1127 = vmatprep.subr.bf16.mxu0 0
    %1128 = vmatpush1.bf16.msra.mxu0 0
    %1129 = vmatprep.subr.bf16.mxu0 0
    %1130 = vmatpush1.bf16.msra.mxu0 0
    %1131 = vmatprep.subr.bf16.mxu0 0
    %1132 = vmatpush1.bf16.msra.mxu0 0
    %1133 = vmatprep.subr.bf16.mxu0 0
    %1134 = vmatpush1.bf16.msra.mxu0 0
    %1135 = vmatprep.subr.bf16.mxu0 0
    %1136 = vmatpush1.bf16.msra.mxu0 0
    %1137 = vmatprep.subr.bf16.mxu0 0
    %1138 = vmatpush1.bf16.msra.mxu0 %v1119
    %1139 = vmatprep.subr.bf16.mxu0 0
    %1140 = vmatpush1.bf16.msra.mxu0 %v1118
    %1141 = vmatprep.subr.bf16.mxu0 0
    %1142 = vmatpush2.bf16.msra.mxu0 0
    %1143 = vmatprep.subr.bf16.mxu0 0
    %1144 = vmatpush2.bf16.msra.mxu0 0
    %1145 = vmatprep.subr.bf16.mxu0 0
    %1146 = vmatpush2.bf16.msra.mxu0 0
    %1147 = vmatprep.subr.bf16.mxu0 0
    %1148 = vmatpush2.bf16.msra.mxu0 0
    %1149 = vmatprep.subr.bf16.mxu0 0
    %1150 = vmatpush2.bf16.msra.mxu0 0
    %1151 = vmatprep.subr.bf16.mxu0 0
    %1152 = vmatpush2.bf16.msra.mxu0 0
    %1153 = vmatprep.subr.bf16.mxu0 0
    %1154 = vmatpush2.bf16.msra.mxu0 0
    %1155 = vmatprep.subr.bf16.mxu0 0
    %1156 = vmatpush2.bf16.msra.mxu0 0
    %1157 = vmatprep.mubr.bf16.mxu0 0
    %1158 = vmatmul.mubr.bf16.gmra.mxu0 %v1123
    %v1159 = vpop.f32.mrf.mxu0
    %v1160 = vadd.f32 %v1106, %v1159
    %v1161 = vpop.f32.mrf.mxu0
    %v1162 = vpop.f32.mrf.mxu0
    %v1163 = vadd.f32 %v1106, %v1162
    %v1164 = vpop.f32.mrf.mxu0
    %1165 = vdwg.mxu0
    %v1166 = vmax.f32 %v1160, 0.0
    %v1167 = vmax.f32 %v1163, 0.0
    %v1168 = vlaneseq
    %v1169 = vshrl.u32 %v1168, 7
    %v1170 = vsub.s32 1, %v1169
    %v1171 = vrot.slane %v671, %v1170
    %v1172 = vmul.f32 %v1166, %v1171
    %v1173 = vmul.f32 %v1167, %v1171
    %v1174 = vlaneseq
    %v1175 = vshrl.u32 %v1174, 7
    %v1176 = vsub.s32 2, %v1175
    %v1177 = vrot.slane %v671, %v1176
    %v1178 = vadd.f32 %v1172, %v1177
    %v1179 = vadd.f32 %v1173, %v1177
    %v1180 = vadd.f32 %v659, %v1178
    %v1181 = vadd.f32 %v660, %v1179
    %v1182 = vld [vmem:[%s16] sm:$0x1]
    %v1183 = vld [vmem:[#allocation2] sm:$0x1]
    %v1184 = vld [vmem:[%s18] sm:$0xf]
    %v1185 = vld [vmem:[%s18 + $0x4] sm:$0xf]
    %v1186 = vld [vmem:[%s18 + $0x8] sm:$0xf]
    %v1187 = vld [vmem:[%s18 + $0xc] sm:$0xf]
    %v1188 = vld [vmem:[%s19] sm:$0x1]
    %v1189 = vld [vmem:[%s20] sm:$0xf]
    %v1190 = vld [vmem:[%s20 + $0x4] sm:$0xf]
    %v1191 = vld [vmem:[%s21] sm:$0x1]
    %v1193 = vlaneseq
    %v1194 = vshrl.u32 %v1193, 7
    %v1195 = vsub.s32 0, %v1194
    %v1196 = vrot.slane %v1182, %v1195
    %v1198 = vmul.f32 %v1180, %v1196
    %v1199 = vmul.f32 %v1181, %v1196
    %v1200 = vsel %vm388, %v1198, 0.0
    %1201 = vadd.xlane.f32.xlu0 %v1200
    %v1202 = vpop.xlane.xlu0 %1201
    %v1203 = vsel %vm388, %v1199, 0.0
    %1204 = vadd.xlane.f32.xlu0 %v1203
    %v1205 = vpop.xlane.xlu0 %1204
    %v1207 = vlaneseq
    %v1208 = vshrl.u32 %v1207, 7
    %v1209 = vsub.s32 0, %v1208
    %v1210 = vrot.slane %v1183, %v1209
    %v1212 = vadd.f32 %v1202, %v1210
    %v1213 = vadd.f32 %v1205, %v1210
    %vm1214 = vcmask 7168
    %v1215 = vsel %vm1214, %v1212, -inf
    %v1216 = vsel %vm1214, %v1213, -inf
    %v1217 = vmax.f32 %v1215, %v1216
    %1218 = vmax.xlane.f32.xlu0 %v1217
    %v1219 = vpop.xlane.xlu0 %1218
    %v1220 = vrot.slane %v1219, 4
    %v1221 = vmax.f32 %v1219, %v1220
    %v1222 = vrot.slane %v1221, 2
    %v1223 = vmax.f32 %v1221, %v1222
    %v1224 = vrot.slane %v1223, 1
    %v1225 = vmax.f32 %v1223, %v1224
    %s1226 = vtos %v1225
    %v1227 = vstv %s1226
    %v1228 = vsub.f32 %v1212, %v1227
    %v1229 = vsub.f32 %v1213, %v1227
    %v1230 = vmul.f32 %v1228, 1.442695
    %v1231 = vpow.pop %v1230
    %v1232 = vmul.f32 %v1229, 1.442695
    %v1233 = vpow.pop %v1232
    %1235 = vset.pattern.permute.xlu0 0
    %1236 = vperm.xlu0 %1235, %v1231
    %v1237 = vpop.permute.xlu0 %1236
    %1240 = vset.pattern.permute.xlu0 0
    %1241 = vperm.xlu0 %1240, %v1233
    %v1242 = vpop.permute.xlu0 %1241
    %v1244 = vmul.f32 %v1237, %v1180
    %v1245 = vmul.f32 %v1242, %v1181
    %1246 = vrot.lane.b32.xlu0 %v1231, 32
    %v1247 = vpop.permute.xlu0 %1246
    %1248 = vrot.lane.b32.xlu0 %v1233, 32
    %v1249 = vpop.permute.xlu0 %1248
    %v1252 = vsel %vm388, %v1244, %v1247
    %v1253 = vsel %vm388, %v1245, %v1249
    %v1254 = vpack.c.bf16 %v1253, %v1252
    %v1256 = vsel %vm167, %v91, 0
    %1258 = vmatprep.subr.bf16.mxu0 0
    %1259 = vmatpush1.bf16.msra.mxu0 0
    %1260 = vmatprep.subr.bf16.mxu0 0
    %1261 = vmatpush1.bf16.msra.mxu0 0
    %1262 = vmatprep.subr.bf16.mxu0 0
    %1263 = vmatpush1.bf16.msra.mxu0 0
    %1264 = vmatprep.subr.bf16.mxu0 0
    %1265 = vmatpush1.bf16.msra.mxu0 0
    %1266 = vmatprep.subr.bf16.mxu0 0
    %1267 = vmatpush1.bf16.msra.mxu0 0
    %1268 = vmatprep.subr.bf16.mxu0 0
    %1269 = vmatpush1.bf16.msra.mxu0 0
    %1270 = vmatprep.subr.bf16.mxu0 0
    %1271 = vmatpush1.bf16.msra.mxu0 0
    %1272 = vmatprep.subr.bf16.mxu0 0
    %1273 = vmatpush1.bf16.msra.mxu0 %v1254
    %1274 = vmatprep.subr.bf16.mxu0 0
    %1275 = vmatpush2.bf16.msra.mxu0 0
    %1276 = vmatprep.subr.bf16.mxu0 0
    %1277 = vmatpush2.bf16.msra.mxu0 0
    %1278 = vmatprep.subr.bf16.mxu0 0
    %1279 = vmatpush2.bf16.msra.mxu0 0
    %1280 = vmatprep.subr.bf16.mxu0 0
    %1281 = vmatpush2.bf16.msra.mxu0 0
    %1282 = vmatprep.subr.bf16.mxu0 0
    %1283 = vmatpush2.bf16.msra.mxu0 0
    %1284 = vmatprep.subr.bf16.mxu0 0
    %1285 = vmatpush2.bf16.msra.mxu0 0
    %1286 = vmatprep.subr.bf16.mxu0 0
    %1287 = vmatpush2.bf16.msra.mxu0 0
    %1288 = vmatprep.subr.bf16.mxu0 0
    %1289 = vmatpush2.bf16.msra.mxu0 0
    %1290 = vmatprep.mubr.bf16.mxu0 0
    %1291 = vmatmul.mubr.bf16.gmra.mxu0 %v1256
    %v1292 = vpop.f32.mrf.mxu0
    %v1293 = vadd.f32 0.0, %v1292
    %v1294 = vpop.f32.mrf.mxu0
    %v1295 = vpop.f32.mrf.mxu0
    %v1296 = vpop.f32.mrf.mxu0
    %1297 = vdwg.mxu0
    %vm1298 = vcmp.gt.f32.partialorder %v1293, 0.0
    %v1299 = vsel %vm1298, %v1293, 1.0
    %v1300 = vrcp.pop %v1299
    %1302 = vset.pattern.permute.xlu0 32
    %1303 = vperm.xlu0 %1302, %v1300
    %v1304 = vpop.permute.xlu0 %1303
    %v1306 = vmul.f32 %v1293, %v1304
    %v1307 = vpack.c.bf16 %v1306, %v1306
    %v1309 = vlaneseq
    %v1310 = vshrl.u32 %v1309, 7
    %v1311 = vsub.s32 0, %v1310
    %v1312 = vrot.slane %v1188, %v1311
    %v1318 = vunpack.c.l.b16 %v1184
    %v1319 = vunpack.c.l.b16 %v1185
    %v1320 = vunpack.c.l.b16 %v1186
    %v1321 = vunpack.c.l.b16 %v1187
    %v1322 = vpack.c.b16 %v1319, %v1318
    %v1323 = vpack.c.b16 %v1321, %v1320
    %v1327 = vsel %vm388, %v1307, 0
    %1329 = vmatprep.subr.bf16.mxu0 0
    %1330 = vmatpush1.bf16.msra.mxu0 0
    %1331 = vmatprep.subr.bf16.mxu0 0
    %1332 = vmatpush1.bf16.msra.mxu0 0
    %1333 = vmatprep.subr.bf16.mxu0 0
    %1334 = vmatpush1.bf16.msra.mxu0 0
    %1335 = vmatprep.subr.bf16.mxu0 0
    %1336 = vmatpush1.bf16.msra.mxu0 0
    %1337 = vmatprep.subr.bf16.mxu0 0
    %1338 = vmatpush1.bf16.msra.mxu0 0
    %1339 = vmatprep.subr.bf16.mxu0 0
    %1340 = vmatpush1.bf16.msra.mxu0 0
    %1341 = vmatprep.subr.bf16.mxu0 0
    %1342 = vmatpush1.bf16.msra.mxu0 %v1323
    %1343 = vmatprep.subr.bf16.mxu0 0
    %1344 = vmatpush1.bf16.msra.mxu0 %v1322
    %1345 = vmatprep.subr.bf16.mxu0 0
    %1346 = vmatpush2.bf16.msra.mxu0 0
    %1347 = vmatprep.subr.bf16.mxu0 0
    %1348 = vmatpush2.bf16.msra.mxu0 0
    %1349 = vmatprep.subr.bf16.mxu0 0
    %1350 = vmatpush2.bf16.msra.mxu0 0
    %1351 = vmatprep.subr.bf16.mxu0 0
    %1352 = vmatpush2.bf16.msra.mxu0 0
    %1353 = vmatprep.subr.bf16.mxu0 0
    %1354 = vmatpush2.bf16.msra.mxu0 0
    %1355 = vmatprep.subr.bf16.mxu0 0
    %1356 = vmatpush2.bf16.msra.mxu0 0
    %1357 = vmatprep.subr.bf16.mxu0 0
    %1358 = vmatpush2.bf16.msra.mxu0 0
    %1359 = vmatprep.subr.bf16.mxu0 0
    %1360 = vmatpush2.bf16.msra.mxu0 0
    %1361 = vmatprep.mubr.bf16.mxu0 0
    %1362 = vmatmul.mubr.bf16.gmra.mxu0 %v1327
    %v1363 = vpop.f32.mrf.mxu0
    %v1364 = vadd.f32 %v1312, %v1363
    %v1365 = vpop.f32.mrf.mxu0
    %v1366 = vpop.f32.mrf.mxu0
    %v1367 = vpop.f32.mrf.mxu0
    %1368 = vdwg.mxu0
    %v1369 = vmax.f32 %v1364, 0.0
    %v1370 = vpack.c.bf16 %v1369, %v1369
    %v1372 = vlaneseq
    %v1373 = vshrl.u32 %v1372, 7
    %v1374 = vsub.s32 0, %v1373
    %v1375 = vrot.slane %v1191, %v1374
    %v1379 = vunpack.c.l.b16 %v1189
    %v1380 = vunpack.c.l.b16 %v1190
    %v1381 = vpack.c.b16 %v1380, %v1379
    %v1384 = vsel %vm167, %v1370, 0
    %1386 = vmatprep.subr.bf16.mxu0 0
    %1387 = vmatpush1.bf16.msra.mxu0 0
    %1388 = vmatprep.subr.bf16.mxu0 0
    %1389 = vmatpush1.bf16.msra.mxu0 0
    %1390 = vmatprep.subr.bf16.mxu0 0
    %1391 = vmatpush1.bf16.msra.mxu0 0
    %1392 = vmatprep.subr.bf16.mxu0 0
    %1393 = vmatpush1.bf16.msra.mxu0 0
    %1394 = vmatprep.subr.bf16.mxu0 0
    %1395 = vmatpush1.bf16.msra.mxu0 0
    %1396 = vmatprep.subr.bf16.mxu0 0
    %1397 = vmatpush1.bf16.msra.mxu0 0
    %1398 = vmatprep.subr.bf16.mxu0 0
    %1399 = vmatpush1.bf16.msra.mxu0 0
    %1400 = vmatprep.subr.bf16.mxu0 0
    %1401 = vmatpush1.bf16.msra.mxu0 %v1381
    %1402 = vmatprep.subr.bf16.mxu0 0
    %1403 = vmatpush2.bf16.msra.mxu0 0
    %1404 = vmatprep.subr.bf16.mxu0 0
    %1405 = vmatpush2.bf16.msra.mxu0 0
    %1406 = vmatprep.subr.bf16.mxu0 0
    %1407 = vmatpush2.bf16.msra.mxu0 0
    %1408 = vmatprep.subr.bf16.mxu0 0
    %1409 = vmatpush2.bf16.msra.mxu0 0
    %1410 = vmatprep.subr.bf16.mxu0 0
    %1411 = vmatpush2.bf16.msra.mxu0 0
    %1412 = vmatprep.subr.bf16.mxu0 0
    %1413 = vmatpush2.bf16.msra.mxu0 0
    %1414 = vmatprep.subr.bf16.mxu0 0
    %1415 = vmatpush2.bf16.msra.mxu0 0
    %1416 = vmatprep.subr.bf16.mxu0 0
    %1417 = vmatpush2.bf16.msra.mxu0 0
    %1418 = vmatprep.mubr.bf16.mxu0 0
    %1419 = vmatmul.mubr.bf16.gmra.mxu0 %v1384
    %v1420 = vpop.f32.mrf.mxu0
    %v1421 = vadd.f32 %v1375, %v1420
    %v1422 = vpop.f32.mrf.mxu0
    %v1423 = vpop.f32.mrf.mxu0
    %v1424 = vpop.f32.mrf.mxu0
    %1425 = vdwg.mxu0
    %vm1426 = vcmask 25600
    %1427 = vst.msk [vmem:[#allocation3] sm:$0x3] %vm1426, %v1421
    // Predicated region
    $region90: #{tpu_custom_call.1} parent=1 // pred_check
      _
    $region91: #{tpu_custom_call.1} parent=1 // pred_check_branch
      %1429 = sbr.rel (0) target = $region93
    $region92: #{tpu_custom_call.1} parent=1 // pred_region
      %s1431 = ssub.s32 32, 32
      %1432 = vsyncadd [#allocation4], %s1431
      %s1434 = sshll.u32 [#allocation3], 4
      %s1435 = int_to_ptr.vmem [resolvable:$true] %s1434
      %1437 = dma.vmem_to_hbm [thread:$0]  %s1435, 32, %s22, [#allocation4]
    $region93: #{tpu_custom_call.1} parent=1 // pred_fallthru
      _
    // Predicated region
    $region94: #{tpu_custom_call.1} parent=1 // pred_check
      _
    $region95: #{tpu_custom_call.1} parent=1 // pred_check_branch
      %1439 = sbr.rel (0) target = $region97
    $region96: #{tpu_custom_call.1} parent=1 // pred_region
      %1440 = dma.done [#allocation4], 32
    $region97: #{tpu_custom_call.1} parent=1 // pred_fallthru
      _
    %1441 = vsyncpa [#allocation4], 1

</llo_original>
